<compile_context>
chip_gen: v7x
topology: tpu7x:2x2x1
jax: 0.10.0
libtpu: 0.0.40
codegen_flags: <defaults>
</compile_context>

<pallas_src>
import jax
import jax.numpy as jnp
import numpy as np
from jax.experimental import pallas as pl
from jax.experimental.pallas import tpu as pltpu


def _make_hybrid_gru_kernel(num_layers: int, seq_len: int, batch: int, hidden: int):
    """Builds a Pallas kernel closure for fixed (num_layers, T, B, H)."""
    T, B, H = seq_len, batch, hidden

    def kernel(*refs):
        # refs layout:
        #   x_ref (T*B, D0)                          -- time-major flattened sequence
        #   [w_ih (D_l,3H), w_hh (H,3H), b_gi (1,3H), b_hn (1,H)] * num_layers
        #   static_ref (B,S),
        #   fc1_wh (H,F), fc1_ws (S,F), fc1_b (1,F), fc2_w (F,O), fc2_b (1,O),
        #   out_ref (B,O),
        #   gi_ref (T*B,3H) scratch, seq_ref (T*B,H) scratch
        x_ref = refs[0]
        layer_refs = refs[1:1 + 4 * num_layers]
        base = 1 + 4 * num_layers
        static_ref = refs[base + 0]
        fc1_wh_ref = refs[base + 1]
        fc1_ws_ref = refs[base + 2]
        fc1_b_ref = refs[base + 3]
        fc2_w_ref = refs[base + 4]
        fc2_b_ref = refs[base + 5]
        out_ref = refs[base + 6]
        gi_ref = refs[base + 7]
        seq_ref = refs[base + 8]

        h = jnp.zeros((B, H), dtype=jnp.float32)

        for layer in range(num_layers):
            w_ih_ref = layer_refs[4 * layer + 0]
            w_hh_ref = layer_refs[4 * layer + 1]
            b_gi_ref = layer_refs[4 * layer + 2]
            b_hn_ref = layer_refs[4 * layer + 3]

            # Whole-sequence input projection: one batched MXU matmul over T*B
            # rows; input-side biases (b_ih + b_hr/b_hz) folded in here once.
            seq_in = x_ref[...] if layer == 0 else seq_ref[...]
            gi_ref[...] = (
                jnp.dot(seq_in, w_ih_ref[...], preferred_element_type=jnp.float32)
                + b_gi_ref[...]
            )

            # Hoisted out of the t loop: recurrent weight load and b_hn broadcast.
            w_hh = w_hh_ref[...]                              # (H, 3H)
            b_hn = jnp.broadcast_to(b_hn_ref[...], (B, H))    # (B, H)

            h = jnp.zeros((B, H), dtype=jnp.float32)          # h_0 = 0 (PyTorch default)
            for t in range(T):                                # static unroll, T small
                gi = gi_ref[t * B:(t + 1) * B, :]             # (B, 3H) precomputed, off chain
                hh = jnp.dot(h, w_hh, preferred_element_type=jnp.float32)  # (B, 3H)

                # PyTorch gate order (r, z, n); fuse r|z into one sigmoid push.
                rz = jax.nn.sigmoid(gi[:, 0:2 * H] + hh[:, 0:2 * H])
                r = rz[:, 0 * H:1 * H]
                z = rz[:, 1 * H:2 * H]
                n = jnp.tanh(gi[:, 2 * H:3 * H] + r * (hh[:, 2 * H:3 * H] + b_hn))
                h = n + z * (h - n)                           # == (1-z)*n + z*h

                if layer < num_layers - 1:
                    # contiguous (B,H) row-block store for the next layer's
                    # batched input projection (not on the recurrent chain)
                    seq_ref[t * B:(t + 1) * B, :] = h

        # h == last-timestep hidden state of the top layer.
        # fc1 on concat([h, static]) done as a split matmul (no lane concat).
        fc1_pre = (
            jnp.dot(h, fc1_wh_ref[...], preferred_element_type=jnp.float32)
            + jnp.dot(static_ref[...], fc1_ws_ref[...], preferred_element_type=jnp.float32)
            + fc1_b_ref[...]
        )
        hidden_act = jnp.maximum(fc1_pre, 0.0)                # ReLU
        out_ref[...] = (
            jnp.dot(hidden_act, fc2_w_ref[...], preferred_element_type=jnp.float32)
            + fc2_b_ref[...]
        )

    return kernel


def hybrid_gru_forward(sequence, static_features, gru_params, fc1_w, fc1_b, fc2_w, fc2_b):
    """Forward pass matching HybridGRU.forward.

    sequence:        (B, T, D) f32        (batch_first, like the PyTorch module)
    static_features: (B, S) f32
    gru_params:      list over layers of PyTorch-layout tensors
                     (w_ih (3H, D_l), w_hh (3H, H), b_ih (3H,), b_hh (3H,)),
                     gate order (r, z, n)
    fc1_w: (F, H+S), fc1_b: (F,), fc2_w: (O, F), fc2_b: (O,)
    Returns (B, O).
    """
    sequence = sequence.astype(jnp.float32)
    static_features = static_features.astype(jnp.float32)

    B, T, D = sequence.shape
    H = gru_params[0][1].shape[1]
    S = static_features.shape[1]
    F = fc1_w.shape[0]
    O = fc2_w.shape[0]
    L = len(gru_params)

    # ---- one-time layout prep outside the kernel (plain XLA ops) ----
    x_tm = jnp.transpose(sequence, (1, 0, 2)).reshape(T * B, D)  # row = t*B + b

    flat_inputs = [x_tm]
    for (w_ih, w_hh, b_ih, b_hh) in gru_params:
        w_ih_t = jnp.transpose(w_ih).astype(jnp.float32)     # (D_l, 3H)
        w_hh_t = jnp.transpose(w_hh).astype(jnp.float32)     # (H, 3H)
        # Fold b_ih and the r/z parts of b_hh into the input projection bias.
        # b_hn must stay separate: n = tanh(W_in x + b_in + r*(W_hn h + b_hn)).
        b_gi = (b_ih + jnp.concatenate(
            [b_hh[:2 * H], jnp.zeros((H,), b_hh.dtype)])).reshape(1, 3 * H).astype(jnp.float32)
        b_hn = b_hh[2 * H:3 * H].reshape(1, H).astype(jnp.float32)
        flat_inputs += [w_ih_t, w_hh_t, b_gi, b_hn]

    fc1_wt = jnp.transpose(fc1_w).astype(jnp.float32)        # (H+S, F)
    flat_inputs += [
        static_features,
        fc1_wt[:H, :],                                       # (H, F)
        fc1_wt[H:, :],                                       # (S, F)
        fc1_b.reshape(1, F).astype(jnp.float32),
        jnp.transpose(fc2_w).astype(jnp.float32),            # (F, O)
        fc2_b.reshape(1, O).astype(jnp.float32),
    ]

    kernel = _make_hybrid_gru_kernel(L, T, B, H)
    vmem = pl.BlockSpec(memory_space=pltpu.MemorySpace.VMEM)

    return pl.pallas_call(
        kernel,
        out_shape=jax.ShapeDtypeStruct((B, O), jnp.float32),
        in_specs=[vmem] * len(flat_inputs),
        out_specs=vmem,
        scratch_shapes=[
            pltpu.VMEM((T * B, 3 * H), jnp.float32),   # batched input projection
            pltpu.VMEM((T * B, H), jnp.float32),       # inter-layer sequence buffer
        ],
    )(*flat_inputs)


def _reference_forward(sequence, static_features, gru_params, fc1_w, fc1_b, fc2_w, fc2_b):
    """Pure-JAX reference of PyTorch nn.GRU(batch_first) + fc1/ReLU/fc2."""
    B, T, _ = sequence.shape
    H = gru_params[0][1].shape[1]
    seq = sequence
    for (w_ih, w_hh, b_ih, b_hh) in gru_params:
        h = jnp.zeros((B, H), jnp.float32)
        outs = []
        for t in range(T):
            x_t = seq[:, t, :]
            gi = x_t @ w_ih.T + b_ih
            gh = h @ w_hh.T + b_hh
            r = jax.nn.sigmoid(gi[:, 0 * H:1 * H] + gh[:, 0 * H:1 * H])
            z = jax.nn.sigmoid(gi[:, 1 * H:2 * H] + gh[:, 1 * H:2 * H])
            n = jnp.tanh(gi[:, 2 * H:3 * H] + r * gh[:, 2 * H:3 * H])
            h = (1.0 - z) * n + z * h
            outs.append(h)
        seq = jnp.stack(outs, axis=1)
    combined = jnp.concatenate([seq[:, -1, :], static_features], axis=1)
    x = jax.nn.relu(combined @ fc1_w.T + fc1_b)
    return x @ fc2_w.T + fc2_b


if __name__ == "__main__":
    # Small shapes consistent with HybridGRU.forward:
    #   sequence (B, T, input_size), static_features (B, static_feature_size)
    B, T, D, H, NUM_LAYERS = 4, 8, 16, 32, 2
    S, FC_LAYER, OUT = 8, 64, 2

    key = jax.random.PRNGKey(0)
    keys = jax.random.split(key, 2 + 4 * NUM_LAYERS + 4)
    kidx = 0

    sequence = jax.random.normal(keys[kidx], (B, T, D), dtype=jnp.float32); kidx += 1
    static_features = jax.random.normal(keys[kidx], (B, S), dtype=jnp.float32); kidx += 1

    bound = 1.0 / np.sqrt(H)  # PyTorch default GRU init range
    gru_params = []
    in_dim = D
    for _ in range(NUM_LAYERS):
        w_ih = jax.random.uniform(keys[kidx], (3 * H, in_dim),
                                  minval=-bound, maxval=bound, dtype=jnp.float32); kidx += 1
        w_hh = jax.random.uniform(keys[kidx], (3 * H, H),
                                  minval=-bound, maxval=bound, dtype=jnp.float32); kidx += 1
        b_ih = jax.random.uniform(keys[kidx], (3 * H,),
                                  minval=-bound, maxval=bound, dtype=jnp.float32); kidx += 1
        b_hh = jax.random.uniform(keys[kidx], (3 * H,),
                                  minval=-bound, maxval=bound, dtype=jnp.float32); kidx += 1
        gru_params.append((w_ih, w_hh, b_ih, b_hh))
        in_dim = H

    b1 = 1.0 / np.sqrt(H + S)
    fc1_w = jax.random.uniform(keys[kidx], (FC_LAYER, H + S),
                               minval=-b1, maxval=b1, dtype=jnp.float32); kidx += 1
    fc1_b = jax.random.uniform(keys[kidx], (FC_LAYER,),
                               minval=-b1, maxval=b1, dtype=jnp.float32); kidx += 1
    b2 = 1.0 / np.sqrt(FC_LAYER)
    fc2_w = jax.random.uniform(keys[kidx], (OUT, FC_LAYER),
                               minval=-b2, maxval=b2, dtype=jnp.float32); kidx += 1
    fc2_b = jax.random.uniform(keys[kidx], (OUT,),
                               minval=-b2, maxval=b2, dtype=jnp.float32); kidx += 1

    out = hybrid_gru_forward(sequence, static_features, gru_params,
                             fc1_w, fc1_b, fc2_w, fc2_b)
    out = jax.block_until_ready(out)

    ref = _reference_forward(sequence, static_features, gru_params,
                             fc1_w, fc1_b, fc2_w, fc2_b)
    np.testing.assert_allclose(np.asarray(out), np.asarray(ref),
                               rtol=1e-4, atol=1e-4)

    print("KERNEL_OK")
</pallas_src>

<mosaic_0001>
module attributes {stable_mosaic.version = 11 : i64} {
  func.func @kernel(%arg0: memref<32x16xf32, #tpu.memory_space<vmem>>, %arg1: memref<16x96xf32, #tpu.memory_space<vmem>>, %arg2: memref<32x96xf32, #tpu.memory_space<vmem>>, %arg3: memref<1x96xf32, #tpu.memory_space<vmem>>, %arg4: memref<1x32xf32, #tpu.memory_space<vmem>>, %arg5: memref<32x96xf32, #tpu.memory_space<vmem>>, %arg6: memref<32x96xf32, #tpu.memory_space<vmem>>, %arg7: memref<1x96xf32, #tpu.memory_space<vmem>>, %arg8: memref<1x32xf32, #tpu.memory_space<vmem>>, %arg9: memref<4x8xf32, #tpu.memory_space<vmem>>, %arg10: memref<32x64xf32, #tpu.memory_space<vmem>>, %arg11: memref<8x64xf32, #tpu.memory_space<vmem>>, %arg12: memref<1x64xf32, #tpu.memory_space<vmem>>, %arg13: memref<64x2xf32, #tpu.memory_space<vmem>>, %arg14: memref<1x2xf32, #tpu.memory_space<vmem>>, %arg15: memref<4x2xf32, #tpu.memory_space<vmem>>, %arg16: memref<32x96xf32, #tpu.memory_space<vmem>>, %arg17: memref<32x32xf32, #tpu.memory_space<vmem>>) attributes {dimension_semantics = [], scalar_prefetch = 0 : i64, scratch_operands = 2 : i64, tpu.core_type = #tpu.core_type<tc>} {
    %c0 = arith.constant 0 : index
    %c0_0 = arith.constant 0 : index
    %0 = vector.load %arg0[%c0, %c0_0] : memref<32x16xf32, #tpu.memory_space<vmem>>, vector<32x16xf32>
    %c0_1 = arith.constant 0 : index
    %c0_2 = arith.constant 0 : index
    %1 = vector.load %arg1[%c0_1, %c0_2] : memref<16x96xf32, #tpu.memory_space<vmem>>, vector<16x96xf32>
    %cst = arith.constant dense<0.000000e+00> : vector<32x96xf32>
    %2 = tpu.matmul %0, %1, %cst {dimension_numbers = #tpu.dot_dimension_numbers<[1], [0], [0], [1], [0, 0, 1, 1], [], []>} : vector<32x16xf32>, vector<16x96xf32>, vector<32x96xf32> -> vector<32x96xf32>
    %c0_3 = arith.constant 0 : index
    %c0_4 = arith.constant 0 : index
    %3 = vector.load %arg3[%c0_3, %c0_4] : memref<1x96xf32, #tpu.memory_space<vmem>>, vector<1x96xf32>
    %4 = vector.broadcast %3 : vector<1x96xf32> to vector<32x96xf32>
    %5 = arith.addf %2, %4 : vector<32x96xf32>
    %c0_5 = arith.constant 0 : index
    %c0_6 = arith.constant 0 : index
    %6 = vector.load %arg16[%c0_5, %c0_6] : memref<32x96xf32, #tpu.memory_space<vmem>>, vector<32x96xf32>
    tpu.vector_store %arg16[%c0_5, %c0_6], %5 {strides = array<i32>} : memref<32x96xf32, #tpu.memory_space<vmem>>, vector<32x96xf32>,
    %c0_7 = arith.constant 0 : index
    %c0_8 = arith.constant 0 : index
    %7 = vector.load %arg2[%c0_7, %c0_8] : memref<32x96xf32, #tpu.memory_space<vmem>>, vector<32x96xf32>
    %c0_9 = arith.constant 0 : index
    %c0_10 = arith.constant 0 : index
    %8 = vector.load %arg4[%c0_9, %c0_10] : memref<1x32xf32, #tpu.memory_space<vmem>>, vector<1x32xf32>
    %9 = vector.shape_cast %8 : vector<1x32xf32> to vector<1x32xf32>
    %10 = vector.broadcast %9 : vector<1x32xf32> to vector<4x32xf32>
    %cst_11 = arith.constant 0.000000e+00 : f32
    %11 = vector.broadcast %cst_11 : f32 to vector<4x32xf32>
    %c0_12 = arith.constant 0 : index
    %c0_13 = arith.constant 0 : index
    %12 = vector.load %arg16[%c0_12, %c0_13] : memref<32x96xf32, #tpu.memory_space<vmem>>, vector<4x96xf32>
    %cst_14 = arith.constant dense<0.000000e+00> : vector<4x96xf32>
    %13 = tpu.matmul %11, %7, %cst_14 {dimension_numbers = #tpu.dot_dimension_numbers<[1], [0], [0], [1], [0, 0, 1, 1], [], []>} : vector<4x32xf32>, vector<32x96xf32>, vector<4x96xf32> -> vector<4x96xf32>
    %14 = vector.extract_strided_slice %12 {offsets = [0, 0], sizes = [4, 64], strides = [1, 1]} : vector<4x96xf32> to vector<4x64xf32>
    %15 = vector.extract_strided_slice %13 {offsets = [0, 0], sizes = [4, 64], strides = [1, 1]} : vector<4x96xf32> to vector<4x64xf32>
    %16 = arith.addf %14, %15 : vector<4x64xf32>
    %17 = arith.negf %16 : vector<4x64xf32>
    %18 = math.exp %17 : vector<4x64xf32>
    %cst_15 = arith.constant 1.000000e+00 : f32
    %19 = vector.broadcast %cst_15 : f32 to vector<4x64xf32>
    %20 = arith.addf %19, %18 : vector<4x64xf32>
    %21 = arith.divf %19, %20 : vector<4x64xf32>
    %22 = vector.extract_strided_slice %21 {offsets = [0, 0], sizes = [4, 32], strides = [1, 1]} : vector<4x64xf32> to vector<4x32xf32>
    %23 = vector.extract_strided_slice %21 {offsets = [0, 32], sizes = [4, 32], strides = [1, 1]} : vector<4x64xf32> to vector<4x32xf32>
    %24 = vector.extract_strided_slice %12 {offsets = [0, 64], sizes = [4, 32], strides = [1, 1]} : vector<4x96xf32> to vector<4x32xf32>
    %25 = vector.extract_strided_slice %13 {offsets = [0, 64], sizes = [4, 32], strides = [1, 1]} : vector<4x96xf32> to vector<4x32xf32>
    %26 = arith.addf %25, %10 : vector<4x32xf32>
    %27 = arith.mulf %22, %26 : vector<4x32xf32>
    %28 = arith.addf %24, %27 : vector<4x32xf32>
    %29 = math.tanh %28 : vector<4x32xf32>
    %30 = arith.subf %11, %29 : vector<4x32xf32>
    %31 = arith.mulf %23, %30 : vector<4x32xf32>
    %32 = arith.addf %29, %31 : vector<4x32xf32>
    %c0_16 = arith.constant 0 : index
    %c0_17 = arith.constant 0 : index
    %33 = vector.load %arg17[%c0_16, %c0_17] : memref<32x32xf32, #tpu.memory_space<vmem>>, vector<4x32xf32>
    tpu.vector_store %arg17[%c0_16, %c0_17], %32 {strides = array<i32>} : memref<32x32xf32, #tpu.memory_space<vmem>>, vector<4x32xf32>,
    %c4 = arith.constant 4 : index
    %c0_18 = arith.constant 0 : index
    %34 = vector.load %arg16[%c4, %c0_18] : memref<32x96xf32, #tpu.memory_space<vmem>>, vector<4x96xf32>
    %cst_19 = arith.constant dense<0.000000e+00> : vector<4x96xf32>
    %35 = tpu.matmul %32, %7, %cst_19 {dimension_numbers = #tpu.dot_dimension_numbers<[1], [0], [0], [1], [0, 0, 1, 1], [], []>} : vector<4x32xf32>, vector<32x96xf32>, vector<4x96xf32> -> vector<4x96xf32>
    %36 = vector.extract_strided_slice %34 {offsets = [0, 0], sizes = [4, 64], strides = [1, 1]} : vector<4x96xf32> to vector<4x64xf32>
    %37 = vector.extract_strided_slice %35 {offsets = [0, 0], sizes = [4, 64], strides = [1, 1]} : vector<4x96xf32> to vector<4x64xf32>
    %38 = arith.addf %36, %37 : vector<4x64xf32>
    %39 = arith.negf %38 : vector<4x64xf32>
    %40 = math.exp %39 : vector<4x64xf32>
    %cst_20 = arith.constant 1.000000e+00 : f32
    %41 = vector.broadcast %cst_20 : f32 to vector<4x64xf32>
    %42 = arith.addf %41, %40 : vector<4x64xf32>
    %43 = arith.divf %41, %42 : vector<4x64xf32>
    %44 = vector.extract_strided_slice %43 {offsets = [0, 0], sizes = [4, 32], strides = [1, 1]} : vector<4x64xf32> to vector<4x32xf32>
    %45 = vector.extract_strided_slice %43 {offsets = [0, 32], sizes = [4, 32], strides = [1, 1]} : vector<4x64xf32> to vector<4x32xf32>
    %46 = vector.extract_strided_slice %34 {offsets = [0, 64], sizes = [4, 32], strides = [1, 1]} : vector<4x96xf32> to vector<4x32xf32>
    %47 = vector.extract_strided_slice %35 {offsets = [0, 64], sizes = [4, 32], strides = [1, 1]} : vector<4x96xf32> to vector<4x32xf32>
    %48 = arith.addf %47, %10 : vector<4x32xf32>
    %49 = arith.mulf %44, %48 : vector<4x32xf32>
    %50 = arith.addf %46, %49 : vector<4x32xf32>
    %51 = math.tanh %50 : vector<4x32xf32>
    %52 = arith.subf %32, %51 : vector<4x32xf32>
    %53 = arith.mulf %45, %52 : vector<4x32xf32>
    %54 = arith.addf %51, %53 : vector<4x32xf32>
    %c4_21 = arith.constant 4 : index
    %c0_22 = arith.constant 0 : index
    %55 = vector.load %arg17[%c4_21, %c0_22] : memref<32x32xf32, #tpu.memory_space<vmem>>, vector<4x32xf32>
    tpu.vector_store %arg17[%c4_21, %c0_22], %54 {strides = array<i32>} : memref<32x32xf32, #tpu.memory_space<vmem>>, vector<4x32xf32>,
    %c8 = arith.constant 8 : index
    %c0_23 = arith.constant 0 : index
    %56 = vector.load %arg16[%c8, %c0_23] : memref<32x96xf32, #tpu.memory_space<vmem>>, vector<4x96xf32>
    %cst_24 = arith.constant dense<0.000000e+00> : vector<4x96xf32>
    %57 = tpu.matmul %54, %7, %cst_24 {dimension_numbers = #tpu.dot_dimension_numbers<[1], [0], [0], [1], [0, 0, 1, 1], [], []>} : vector<4x32xf32>, vector<32x96xf32>, vector<4x96xf32> -> vector<4x96xf32>
    %58 = vector.extract_strided_slice %56 {offsets = [0, 0], sizes = [4, 64], strides = [1, 1]} : vector<4x96xf32> to vector<4x64xf32>
    %59 = vector.extract_strided_slice %57 {offsets = [0, 0], sizes = [4, 64], strides = [1, 1]} : vector<4x96xf32> to vector<4x64xf32>
    %60 = arith.addf %58, %59 : vector<4x64xf32>
    %61 = arith.negf %60 : vector<4x64xf32>
    %62 = math.exp %61 : vector<4x64xf32>
    %cst_25 = arith.constant 1.000000e+00 : f32
    %63 = vector.broadcast %cst_25 : f32 to vector<4x64xf32>
    %64 = arith.addf %63, %62 : vector<4x64xf32>
    %65 = arith.divf %63, %64 : vector<4x64xf32>
    %66 = vector.extract_strided_slice %65 {offsets = [0, 0], sizes = [4, 32], strides = [1, 1]} : vector<4x64xf32> to vector<4x32xf32>
    %67 = vector.extract_strided_slice %65 {offsets = [0, 32], sizes = [4, 32], strides = [1, 1]} : vector<4x64xf32> to vector<4x32xf32>
    %68 = vector.extract_strided_slice %56 {offsets = [0, 64], sizes = [4, 32], strides = [1, 1]} : vector<4x96xf32> to vector<4x32xf32>
    %69 = vector.extract_strided_slice %57 {offsets = [0, 64], sizes = [4, 32], strides = [1, 1]} : vector<4x96xf32> to vector<4x32xf32>
    %70 = arith.addf %69, %10 : vector<4x32xf32>
    %71 = arith.mulf %66, %70 : vector<4x32xf32>
    %72 = arith.addf %68, %71 : vector<4x32xf32>
    %73 = math.tanh %72 : vector<4x32xf32>
    %74 = arith.subf %54, %73 : vector<4x32xf32>
    %75 = arith.mulf %67, %74 : vector<4x32xf32>
    %76 = arith.addf %73, %75 : vector<4x32xf32>
    %c8_26 = arith.constant 8 : index
    %c0_27 = arith.constant 0 : index
    %77 = vector.load %arg17[%c8_26, %c0_27] : memref<32x32xf32, #tpu.memory_space<vmem>>, vector<4x32xf32>
    tpu.vector_store %arg17[%c8_26, %c0_27], %76 {strides = array<i32>} : memref<32x32xf32, #tpu.memory_space<vmem>>, vector<4x32xf32>,
    %c12 = arith.constant 12 : index
    %c0_28 = arith.constant 0 : index
    %78 = vector.load %arg16[%c12, %c0_28] : memref<32x96xf32, #tpu.memory_space<vmem>>, vector<4x96xf32>
    %cst_29 = arith.constant dense<0.000000e+00> : vector<4x96xf32>
    %79 = tpu.matmul %76, %7, %cst_29 {dimension_numbers = #tpu.dot_dimension_numbers<[1], [0], [0], [1], [0, 0, 1, 1], [], []>} : vector<4x32xf32>, vector<32x96xf32>, vector<4x96xf32> -> vector<4x96xf32>
    %80 = vector.extract_strided_slice %78 {offsets = [0, 0], sizes = [4, 64], strides = [1, 1]} : vector<4x96xf32> to vector<4x64xf32>
    %81 = vector.extract_strided_slice %79 {offsets = [0, 0], sizes = [4, 64], strides = [1, 1]} : vector<4x96xf32> to vector<4x64xf32>
    %82 = arith.addf %80, %81 : vector<4x64xf32>
    %83 = arith.negf %82 : vector<4x64xf32>
    %84 = math.exp %83 : vector<4x64xf32>
    %cst_30 = arith.constant 1.000000e+00 : f32
    %85 = vector.broadcast %cst_30 : f32 to vector<4x64xf32>
    %86 = arith.addf %85, %84 : vector<4x64xf32>
    %87 = arith.divf %85, %86 : vector<4x64xf32>
    %88 = vector.extract_strided_slice %87 {offsets = [0, 0], sizes = [4, 32], strides = [1, 1]} : vector<4x64xf32> to vector<4x32xf32>
    %89 = vector.extract_strided_slice %87 {offsets = [0, 32], sizes = [4, 32], strides = [1, 1]} : vector<4x64xf32> to vector<4x32xf32>
    %90 = vector.extract_strided_slice %78 {offsets = [0, 64], sizes = [4, 32], strides = [1, 1]} : vector<4x96xf32> to vector<4x32xf32>
    %91 = vector.extract_strided_slice %79 {offsets = [0, 64], sizes = [4, 32], strides = [1, 1]} : vector<4x96xf32> to vector<4x32xf32>
    %92 = arith.addf %91, %10 : vector<4x32xf32>
    %93 = arith.mulf %88, %92 : vector<4x32xf32>
    %94 = arith.addf %90, %93 : vector<4x32xf32>
    %95 = math.tanh %94 : vector<4x32xf32>
    %96 = arith.subf %76, %95 : vector<4x32xf32>
    %97 = arith.mulf %89, %96 : vector<4x32xf32>
    %98 = arith.addf %95, %97 : vector<4x32xf32>
    %c12_31 = arith.constant 12 : index
    %c0_32 = arith.constant 0 : index
    %99 = vector.load %arg17[%c12_31, %c0_32] : memref<32x32xf32, #tpu.memory_space<vmem>>, vector<4x32xf32>
    tpu.vector_store %arg17[%c12_31, %c0_32], %98 {strides = array<i32>} : memref<32x32xf32, #tpu.memory_space<vmem>>, vector<4x32xf32>,
    %c16 = arith.constant 16 : index
    %c0_33 = arith.constant 0 : index
    %100 = vector.load %arg16[%c16, %c0_33] : memref<32x96xf32, #tpu.memory_space<vmem>>, vector<4x96xf32>
    %cst_34 = arith.constant dense<0.000000e+00> : vector<4x96xf32>
    %101 = tpu.matmul %98, %7, %cst_34 {dimension_numbers = #tpu.dot_dimension_numbers<[1], [0], [0], [1], [0, 0, 1, 1], [], []>} : vector<4x32xf32>, vector<32x96xf32>, vector<4x96xf32> -> vector<4x96xf32>
    %102 = vector.extract_strided_slice %100 {offsets = [0, 0], sizes = [4, 64], strides = [1, 1]} : vector<4x96xf32> to vector<4x64xf32>
    %103 = vector.extract_strided_slice %101 {offsets = [0, 0], sizes = [4, 64], strides = [1, 1]} : vector<4x96xf32> to vector<4x64xf32>
    %104 = arith.addf %102, %103 : vector<4x64xf32>
    %105 = arith.negf %104 : vector<4x64xf32>
    %106 = math.exp %105 : vector<4x64xf32>
    %cst_35 = arith.constant 1.000000e+00 : f32
    %107 = vector.broadcast %cst_35 : f32 to vector<4x64xf32>
    %108 = arith.addf %107, %106 : vector<4x64xf32>
    %109 = arith.divf %107, %108 : vector<4x64xf32>
    %110 = vector.extract_strided_slice %109 {offsets = [0, 0], sizes = [4, 32], strides = [1, 1]} : vector<4x64xf32> to vector<4x32xf32>
    %111 = vector.extract_strided_slice %109 {offsets = [0, 32], sizes = [4, 32], strides = [1, 1]} : vector<4x64xf32> to vector<4x32xf32>
    %112 = vector.extract_strided_slice %100 {offsets = [0, 64], sizes = [4, 32], strides = [1, 1]} : vector<4x96xf32> to vector<4x32xf32>
    %113 = vector.extract_strided_slice %101 {offsets = [0, 64], sizes = [4, 32], strides = [1, 1]} : vector<4x96xf32> to vector<4x32xf32>
    %114 = arith.addf %113, %10 : vector<4x32xf32>
    %115 = arith.mulf %110, %114 : vector<4x32xf32>
    %116 = arith.addf %112, %115 : vector<4x32xf32>
    %117 = math.tanh %116 : vector<4x32xf32>
    %118 = arith.subf %98, %117 : vector<4x32xf32>
    %119 = arith.mulf %111, %118 : vector<4x32xf32>
    %120 = arith.addf %117, %119 : vector<4x32xf32>
    %c16_36 = arith.constant 16 : index
    %c0_37 = arith.constant 0 : index
    %121 = vector.load %arg17[%c16_36, %c0_37] : memref<32x32xf32, #tpu.memory_space<vmem>>, vector<4x32xf32>
    tpu.vector_store %arg17[%c16_36, %c0_37], %120 {strides = array<i32>} : memref<32x32xf32, #tpu.memory_space<vmem>>, vector<4x32xf32>,
    %c20 = arith.constant 20 : index
    %c0_38 = arith.constant 0 : index
    %122 = vector.load %arg16[%c20, %c0_38] : memref<32x96xf32, #tpu.memory_space<vmem>>, vector<4x96xf32>
    %cst_39 = arith.constant dense<0.000000e+00> : vector<4x96xf32>
    %123 = tpu.matmul %120, %7, %cst_39 {dimension_numbers = #tpu.dot_dimension_numbers<[1], [0], [0], [1], [0, 0, 1, 1], [], []>} : vector<4x32xf32>, vector<32x96xf32>, vector<4x96xf32> -> vector<4x96xf32>
    %124 = vector.extract_strided_slice %122 {offsets = [0, 0], sizes = [4, 64], strides = [1, 1]} : vector<4x96xf32> to vector<4x64xf32>
    %125 = vector.extract_strided_slice %123 {offsets = [0, 0], sizes = [4, 64], strides = [1, 1]} : vector<4x96xf32> to vector<4x64xf32>
    %126 = arith.addf %124, %125 : vector<4x64xf32>
    %127 = arith.negf %126 : vector<4x64xf32>
    %128 = math.exp %127 : vector<4x64xf32>
    %cst_40 = arith.constant 1.000000e+00 : f32
    %129 = vector.broadcast %cst_40 : f32 to vector<4x64xf32>
    %130 = arith.addf %129, %128 : vector<4x64xf32>
    %131 = arith.divf %129, %130 : vector<4x64xf32>
    %132 = vector.extract_strided_slice %131 {offsets = [0, 0], sizes = [4, 32], strides = [1, 1]} : vector<4x64xf32> to vector<4x32xf32>
    %133 = vector.extract_strided_slice %131 {offsets = [0, 32], sizes = [4, 32], strides = [1, 1]} : vector<4x64xf32> to vector<4x32xf32>
    %134 = vector.extract_strided_slice %122 {offsets = [0, 64], sizes = [4, 32], strides = [1, 1]} : vector<4x96xf32> to vector<4x32xf32>
    %135 = vector.extract_strided_slice %123 {offsets = [0, 64], sizes = [4, 32], strides = [1, 1]} : vector<4x96xf32> to vector<4x32xf32>
    %136 = arith.addf %135, %10 : vector<4x32xf32>
    %137 = arith.mulf %132, %136 : vector<4x32xf32>
    %138 = arith.addf %134, %137 : vector<4x32xf32>
    %139 = math.tanh %138 : vector<4x32xf32>
    %140 = arith.subf %120, %139 : vector<4x32xf32>
    %141 = arith.mulf %133, %140 : vector<4x32xf32>
    %142 = arith.addf %139, %141 : vector<4x32xf32>
    %c20_41 = arith.constant 20 : index
    %c0_42 = arith.constant 0 : index
    %143 = vector.load %arg17[%c20_41, %c0_42] : memref<32x32xf32, #tpu.memory_space<vmem>>, vector<4x32xf32>
    tpu.vector_store %arg17[%c20_41, %c0_42], %142 {strides = array<i32>} : memref<32x32xf32, #tpu.memory_space<vmem>>, vector<4x32xf32>,
    %c24 = arith.constant 24 : index
    %c0_43 = arith.constant 0 : index
    %144 = vector.load %arg16[%c24, %c0_43] : memref<32x96xf32, #tpu.memory_space<vmem>>, vector<4x96xf32>
    %cst_44 = arith.constant dense<0.000000e+00> : vector<4x96xf32>
    %145 = tpu.matmul %142, %7, %cst_44 {dimension_numbers = #tpu.dot_dimension_numbers<[1], [0], [0], [1], [0, 0, 1, 1], [], []>} : vector<4x32xf32>, vector<32x96xf32>, vector<4x96xf32> -> vector<4x96xf32>
    %146 = vector.extract_strided_slice %144 {offsets = [0, 0], sizes = [4, 64], strides = [1, 1]} : vector<4x96xf32> to vector<4x64xf32>
    %147 = vector.extract_strided_slice %145 {offsets = [0, 0], sizes = [4, 64], strides = [1, 1]} : vector<4x96xf32> to vector<4x64xf32>
    %148 = arith.addf %146, %147 : vector<4x64xf32>
    %149 = arith.negf %148 : vector<4x64xf32>
    %150 = math.exp %149 : vector<4x64xf32>
    %cst_45 = arith.constant 1.000000e+00 : f32
    %151 = vector.broadcast %cst_45 : f32 to vector<4x64xf32>
    %152 = arith.addf %151, %150 : vector<4x64xf32>
    %153 = arith.divf %151, %152 : vector<4x64xf32>
    %154 = vector.extract_strided_slice %153 {offsets = [0, 0], sizes = [4, 32], strides = [1, 1]} : vector<4x64xf32> to vector<4x32xf32>
    %155 = vector.extract_strided_slice %153 {offsets = [0, 32], sizes = [4, 32], strides = [1, 1]} : vector<4x64xf32> to vector<4x32xf32>
    %156 = vector.extract_strided_slice %144 {offsets = [0, 64], sizes = [4, 32], strides = [1, 1]} : vector<4x96xf32> to vector<4x32xf32>
    %157 = vector.extract_strided_slice %145 {offsets = [0, 64], sizes = [4, 32], strides = [1, 1]} : vector<4x96xf32> to vector<4x32xf32>
    %158 = arith.addf %157, %10 : vector<4x32xf32>
    %159 = arith.mulf %154, %158 : vector<4x32xf32>
    %160 = arith.addf %156, %159 : vector<4x32xf32>
    %161 = math.tanh %160 : vector<4x32xf32>
    %162 = arith.subf %142, %161 : vector<4x32xf32>
    %163 = arith.mulf %155, %162 : vector<4x32xf32>
    %164 = arith.addf %161, %163 : vector<4x32xf32>
    %c24_46 = arith.constant 24 : index
    %c0_47 = arith.constant 0 : index
    %165 = vector.load %arg17[%c24_46, %c0_47] : memref<32x32xf32, #tpu.memory_space<vmem>>, vector<4x32xf32>
    tpu.vector_store %arg17[%c24_46, %c0_47], %164 {strides = array<i32>} : memref<32x32xf32, #tpu.memory_space<vmem>>, vector<4x32xf32>,
    %c28 = arith.constant 28 : index
    %c0_48 = arith.constant 0 : index
    %166 = vector.load %arg16[%c28, %c0_48] : memref<32x96xf32, #tpu.memory_space<vmem>>, vector<4x96xf32>
    %cst_49 = arith.constant dense<0.000000e+00> : vector<4x96xf32>
    %167 = tpu.matmul %164, %7, %cst_49 {dimension_numbers = #tpu.dot_dimension_numbers<[1], [0], [0], [1], [0, 0, 1, 1], [], []>} : vector<4x32xf32>, vector<32x96xf32>, vector<4x96xf32> -> vector<4x96xf32>
    %168 = vector.extract_strided_slice %166 {offsets = [0, 0], sizes = [4, 64], strides = [1, 1]} : vector<4x96xf32> to vector<4x64xf32>
    %169 = vector.extract_strided_slice %167 {offsets = [0, 0], sizes = [4, 64], strides = [1, 1]} : vector<4x96xf32> to vector<4x64xf32>
    %170 = arith.addf %168, %169 : vector<4x64xf32>
    %171 = arith.negf %170 : vector<4x64xf32>
    %172 = math.exp %171 : vector<4x64xf32>
    %cst_50 = arith.constant 1.000000e+00 : f32
    %173 = vector.broadcast %cst_50 : f32 to vector<4x64xf32>
    %174 = arith.addf %173, %172 : vector<4x64xf32>
    %175 = arith.divf %173, %174 : vector<4x64xf32>
    %176 = vector.extract_strided_slice %175 {offsets = [0, 0], sizes = [4, 32], strides = [1, 1]} : vector<4x64xf32> to vector<4x32xf32>
    %177 = vector.extract_strided_slice %175 {offsets = [0, 32], sizes = [4, 32], strides = [1, 1]} : vector<4x64xf32> to vector<4x32xf32>
    %178 = vector.extract_strided_slice %166 {offsets = [0, 64], sizes = [4, 32], strides = [1, 1]} : vector<4x96xf32> to vector<4x32xf32>
    %179 = vector.extract_strided_slice %167 {offsets = [0, 64], sizes = [4, 32], strides = [1, 1]} : vector<4x96xf32> to vector<4x32xf32>
    %180 = arith.addf %179, %10 : vector<4x32xf32>
    %181 = arith.mulf %176, %180 : vector<4x32xf32>
    %182 = arith.addf %178, %181 : vector<4x32xf32>
    %183 = math.tanh %182 : vector<4x32xf32>
    %184 = arith.subf %164, %183 : vector<4x32xf32>
    %185 = arith.mulf %177, %184 : vector<4x32xf32>
    %186 = arith.addf %183, %185 : vector<4x32xf32>
    %c28_51 = arith.constant 28 : index
    %c0_52 = arith.constant 0 : index
    %187 = vector.load %arg17[%c28_51, %c0_52] : memref<32x32xf32, #tpu.memory_space<vmem>>, vector<4x32xf32>
    tpu.vector_store %arg17[%c28_51, %c0_52], %186 {strides = array<i32>} : memref<32x32xf32, #tpu.memory_space<vmem>>, vector<4x32xf32>,
    %c0_53 = arith.constant 0 : index
    %c0_54 = arith.constant 0 : index
    %188 = vector.load %arg17[%c0_53, %c0_54] : memref<32x32xf32, #tpu.memory_space<vmem>>, vector<32x32xf32>
    %c0_55 = arith.constant 0 : index
    %c0_56 = arith.constant 0 : index
    %189 = vector.load %arg5[%c0_55, %c0_56] : memref<32x96xf32, #tpu.memory_space<vmem>>, vector<32x96xf32>
    %cst_57 = arith.constant dense<0.000000e+00> : vector<32x96xf32>
    %190 = tpu.matmul %188, %189, %cst_57 {dimension_numbers = #tpu.dot_dimension_numbers<[1], [0], [0], [1], [0, 0, 1, 1], [], []>} : vector<32x32xf32>, vector<32x96xf32>, vector<32x96xf32> -> vector<32x96xf32>
    %c0_58 = arith.constant 0 : index
    %c0_59 = arith.constant 0 : index
    %191 = vector.load %arg7[%c0_58, %c0_59] : memref<1x96xf32, #tpu.memory_space<vmem>>, vector<1x96xf32>
    %192 = vector.broadcast %191 : vector<1x96xf32> to vector<32x96xf32>
    %193 = arith.addf %190, %192 : vector<32x96xf32>
    %c0_60 = arith.constant 0 : index
    %c0_61 = arith.constant 0 : index
    %194 = vector.load %arg16[%c0_60, %c0_61] : memref<32x96xf32, #tpu.memory_space<vmem>>, vector<32x96xf32>
    tpu.vector_store %arg16[%c0_60, %c0_61], %193 {strides = array<i32>} : memref<32x96xf32, #tpu.memory_space<vmem>>, vector<32x96xf32>,
    %c0_62 = arith.constant 0 : index
    %c0_63 = arith.constant 0 : index
    %195 = vector.load %arg6[%c0_62, %c0_63] : memref<32x96xf32, #tpu.memory_space<vmem>>, vector<32x96xf32>
    %c0_64 = arith.constant 0 : index
    %c0_65 = arith.constant 0 : index
    %196 = vector.load %arg8[%c0_64, %c0_65] : memref<1x32xf32, #tpu.memory_space<vmem>>, vector<1x32xf32>
    %197 = vector.shape_cast %196 : vector<1x32xf32> to vector<1x32xf32>
    %198 = vector.broadcast %197 : vector<1x32xf32> to vector<4x32xf32>
    %cst_66 = arith.constant 0.000000e+00 : f32
    %199 = vector.broadcast %cst_66 : f32 to vector<4x32xf32>
    %c0_67 = arith.constant 0 : index
    %c0_68 = arith.constant 0 : index
    %200 = vector.load %arg16[%c0_67, %c0_68] : memref<32x96xf32, #tpu.memory_space<vmem>>, vector<4x96xf32>
    %cst_69 = arith.constant dense<0.000000e+00> : vector<4x96xf32>
    %201 = tpu.matmul %199, %195, %cst_69 {dimension_numbers = #tpu.dot_dimension_numbers<[1], [0], [0], [1], [0, 0, 1, 1], [], []>} : vector<4x32xf32>, vector<32x96xf32>, vector<4x96xf32> -> vector<4x96xf32>
    %202 = vector.extract_strided_slice %200 {offsets = [0, 0], sizes = [4, 64], strides = [1, 1]} : vector<4x96xf32> to vector<4x64xf32>
    %203 = vector.extract_strided_slice %201 {offsets = [0, 0], sizes = [4, 64], strides = [1, 1]} : vector<4x96xf32> to vector<4x64xf32>
    %204 = arith.addf %202, %203 : vector<4x64xf32>
    %205 = arith.negf %204 : vector<4x64xf32>
    %206 = math.exp %205 : vector<4x64xf32>
    %cst_70 = arith.constant 1.000000e+00 : f32
    %207 = vector.broadcast %cst_70 : f32 to vector<4x64xf32>
    %208 = arith.addf %207, %206 : vector<4x64xf32>
    %209 = arith.divf %207, %208 : vector<4x64xf32>
    %210 = vector.extract_strided_slice %209 {offsets = [0, 0], sizes = [4, 32], strides = [1, 1]} : vector<4x64xf32> to vector<4x32xf32>
    %211 = vector.extract_strided_slice %209 {offsets = [0, 32], sizes = [4, 32], strides = [1, 1]} : vector<4x64xf32> to vector<4x32xf32>
    %212 = vector.extract_strided_slice %200 {offsets = [0, 64], sizes = [4, 32], strides = [1, 1]} : vector<4x96xf32> to vector<4x32xf32>
    %213 = vector.extract_strided_slice %201 {offsets = [0, 64], sizes = [4, 32], strides = [1, 1]} : vector<4x96xf32> to vector<4x32xf32>
    %214 = arith.addf %213, %198 : vector<4x32xf32>
    %215 = arith.mulf %210, %214 : vector<4x32xf32>
    %216 = arith.addf %212, %215 : vector<4x32xf32>
    %217 = math.tanh %216 : vector<4x32xf32>
    %218 = arith.subf %199, %217 : vector<4x32xf32>
    %219 = arith.mulf %211, %218 : vector<4x32xf32>
    %220 = arith.addf %217, %219 : vector<4x32xf32>
    %c4_71 = arith.constant 4 : index
    %c0_72 = arith.constant 0 : index
    %221 = vector.load %arg16[%c4_71, %c0_72] : memref<32x96xf32, #tpu.memory_space<vmem>>, vector<4x96xf32>
    %cst_73 = arith.constant dense<0.000000e+00> : vector<4x96xf32>
    %222 = tpu.matmul %220, %195, %cst_73 {dimension_numbers = #tpu.dot_dimension_numbers<[1], [0], [0], [1], [0, 0, 1, 1], [], []>} : vector<4x32xf32>, vector<32x96xf32>, vector<4x96xf32> -> vector<4x96xf32>
    %223 = vector.extract_strided_slice %221 {offsets = [0, 0], sizes = [4, 64], strides = [1, 1]} : vector<4x96xf32> to vector<4x64xf32>
    %224 = vector.extract_strided_slice %222 {offsets = [0, 0], sizes = [4, 64], strides = [1, 1]} : vector<4x96xf32> to vector<4x64xf32>
    %225 = arith.addf %223, %224 : vector<4x64xf32>
    %226 = arith.negf %225 : vector<4x64xf32>
    %227 = math.exp %226 : vector<4x64xf32>
    %cst_74 = arith.constant 1.000000e+00 : f32
    %228 = vector.broadcast %cst_74 : f32 to vector<4x64xf32>
    %229 = arith.addf %228, %227 : vector<4x64xf32>
    %230 = arith.divf %228, %229 : vector<4x64xf32>
    %231 = vector.extract_strided_slice %230 {offsets = [0, 0], sizes = [4, 32], strides = [1, 1]} : vector<4x64xf32> to vector<4x32xf32>
    %232 = vector.extract_strided_slice %230 {offsets = [0, 32], sizes = [4, 32], strides = [1, 1]} : vector<4x64xf32> to vector<4x32xf32>
    %233 = vector.extract_strided_slice %221 {offsets = [0, 64], sizes = [4, 32], strides = [1, 1]} : vector<4x96xf32> to vector<4x32xf32>
    %234 = vector.extract_strided_slice %222 {offsets = [0, 64], sizes = [4, 32], strides = [1, 1]} : vector<4x96xf32> to vector<4x32xf32>
    %235 = arith.addf %234, %198 : vector<4x32xf32>
    %236 = arith.mulf %231, %235 : vector<4x32xf32>
    %237 = arith.addf %233, %236 : vector<4x32xf32>
    %238 = math.tanh %237 : vector<4x32xf32>
    %239 = arith.subf %220, %238 : vector<4x32xf32>
    %240 = arith.mulf %232, %239 : vector<4x32xf32>
    %241 = arith.addf %238, %240 : vector<4x32xf32>
    %c8_75 = arith.constant 8 : index
    %c0_76 = arith.constant 0 : index
    %242 = vector.load %arg16[%c8_75, %c0_76] : memref<32x96xf32, #tpu.memory_space<vmem>>, vector<4x96xf32>
    %cst_77 = arith.constant dense<0.000000e+00> : vector<4x96xf32>
    %243 = tpu.matmul %241, %195, %cst_77 {dimension_numbers = #tpu.dot_dimension_numbers<[1], [0], [0], [1], [0, 0, 1, 1], [], []>} : vector<4x32xf32>, vector<32x96xf32>, vector<4x96xf32> -> vector<4x96xf32>
    %244 = vector.extract_strided_slice %242 {offsets = [0, 0], sizes = [4, 64], strides = [1, 1]} : vector<4x96xf32> to vector<4x64xf32>
    %245 = vector.extract_strided_slice %243 {offsets = [0, 0], sizes = [4, 64], strides = [1, 1]} : vector<4x96xf32> to vector<4x64xf32>
    %246 = arith.addf %244, %245 : vector<4x64xf32>
    %247 = arith.negf %246 : vector<4x64xf32>
    %248 = math.exp %247 : vector<4x64xf32>
    %cst_78 = arith.constant 1.000000e+00 : f32
    %249 = vector.broadcast %cst_78 : f32 to vector<4x64xf32>
    %250 = arith.addf %249, %248 : vector<4x64xf32>
    %251 = arith.divf %249, %250 : vector<4x64xf32>
    %252 = vector.extract_strided_slice %251 {offsets = [0, 0], sizes = [4, 32], strides = [1, 1]} : vector<4x64xf32> to vector<4x32xf32>
    %253 = vector.extract_strided_slice %251 {offsets = [0, 32], sizes = [4, 32], strides = [1, 1]} : vector<4x64xf32> to vector<4x32xf32>
    %254 = vector.extract_strided_slice %242 {offsets = [0, 64], sizes = [4, 32], strides = [1, 1]} : vector<4x96xf32> to vector<4x32xf32>
    %255 = vector.extract_strided_slice %243 {offsets = [0, 64], sizes = [4, 32], strides = [1, 1]} : vector<4x96xf32> to vector<4x32xf32>
    %256 = arith.addf %255, %198 : vector<4x32xf32>
    %257 = arith.mulf %252, %256 : vector<4x32xf32>
    %258 = arith.addf %254, %257 : vector<4x32xf32>
    %259 = math.tanh %258 : vector<4x32xf32>
    %260 = arith.subf %241, %259 : vector<4x32xf32>
    %261 = arith.mulf %253, %260 : vector<4x32xf32>
    %262 = arith.addf %259, %261 : vector<4x32xf32>
    %c12_79 = arith.constant 12 : index
    %c0_80 = arith.constant 0 : index
    %263 = vector.load %arg16[%c12_79, %c0_80] : memref<32x96xf32, #tpu.memory_space<vmem>>, vector<4x96xf32>
    %cst_81 = arith.constant dense<0.000000e+00> : vector<4x96xf32>
    %264 = tpu.matmul %262, %195, %cst_81 {dimension_numbers = #tpu.dot_dimension_numbers<[1], [0], [0], [1], [0, 0, 1, 1], [], []>} : vector<4x32xf32>, vector<32x96xf32>, vector<4x96xf32> -> vector<4x96xf32>
    %265 = vector.extract_strided_slice %263 {offsets = [0, 0], sizes = [4, 64], strides = [1, 1]} : vector<4x96xf32> to vector<4x64xf32>
    %266 = vector.extract_strided_slice %264 {offsets = [0, 0], sizes = [4, 64], strides = [1, 1]} : vector<4x96xf32> to vector<4x64xf32>
    %267 = arith.addf %265, %266 : vector<4x64xf32>
    %268 = arith.negf %267 : vector<4x64xf32>
    %269 = math.exp %268 : vector<4x64xf32>
    %cst_82 = arith.constant 1.000000e+00 : f32
    %270 = vector.broadcast %cst_82 : f32 to vector<4x64xf32>
    %271 = arith.addf %270, %269 : vector<4x64xf32>
    %272 = arith.divf %270, %271 : vector<4x64xf32>
    %273 = vector.extract_strided_slice %272 {offsets = [0, 0], sizes = [4, 32], strides = [1, 1]} : vector<4x64xf32> to vector<4x32xf32>
    %274 = vector.extract_strided_slice %272 {offsets = [0, 32], sizes = [4, 32], strides = [1, 1]} : vector<4x64xf32> to vector<4x32xf32>
    %275 = vector.extract_strided_slice %263 {offsets = [0, 64], sizes = [4, 32], strides = [1, 1]} : vector<4x96xf32> to vector<4x32xf32>
    %276 = vector.extract_strided_slice %264 {offsets = [0, 64], sizes = [4, 32], strides = [1, 1]} : vector<4x96xf32> to vector<4x32xf32>
    %277 = arith.addf %276, %198 : vector<4x32xf32>
    %278 = arith.mulf %273, %277 : vector<4x32xf32>
    %279 = arith.addf %275, %278 : vector<4x32xf32>
    %280 = math.tanh %279 : vector<4x32xf32>
    %281 = arith.subf %262, %280 : vector<4x32xf32>
    %282 = arith.mulf %274, %281 : vector<4x32xf32>
    %283 = arith.addf %280, %282 : vector<4x32xf32>
    %c16_83 = arith.constant 16 : index
    %c0_84 = arith.constant 0 : index
    %284 = vector.load %arg16[%c16_83, %c0_84] : memref<32x96xf32, #tpu.memory_space<vmem>>, vector<4x96xf32>
    %cst_85 = arith.constant dense<0.000000e+00> : vector<4x96xf32>
    %285 = tpu.matmul %283, %195, %cst_85 {dimension_numbers = #tpu.dot_dimension_numbers<[1], [0], [0], [1], [0, 0, 1, 1], [], []>} : vector<4x32xf32>, vector<32x96xf32>, vector<4x96xf32> -> vector<4x96xf32>
    %286 = vector.extract_strided_slice %284 {offsets = [0, 0], sizes = [4, 64], strides = [1, 1]} : vector<4x96xf32> to vector<4x64xf32>
    %287 = vector.extract_strided_slice %285 {offsets = [0, 0], sizes = [4, 64], strides = [1, 1]} : vector<4x96xf32> to vector<4x64xf32>
    %288 = arith.addf %286, %287 : vector<4x64xf32>
    %289 = arith.negf %288 : vector<4x64xf32>
    %290 = math.exp %289 : vector<4x64xf32>
    %cst_86 = arith.constant 1.000000e+00 : f32
    %291 = vector.broadcast %cst_86 : f32 to vector<4x64xf32>
    %292 = arith.addf %291, %290 : vector<4x64xf32>
    %293 = arith.divf %291, %292 : vector<4x64xf32>
    %294 = vector.extract_strided_slice %293 {offsets = [0, 0], sizes = [4, 32], strides = [1, 1]} : vector<4x64xf32> to vector<4x32xf32>
    %295 = vector.extract_strided_slice %293 {offsets = [0, 32], sizes = [4, 32], strides = [1, 1]} : vector<4x64xf32> to vector<4x32xf32>
    %296 = vector.extract_strided_slice %284 {offsets = [0, 64], sizes = [4, 32], strides = [1, 1]} : vector<4x96xf32> to vector<4x32xf32>
    %297 = vector.extract_strided_slice %285 {offsets = [0, 64], sizes = [4, 32], strides = [1, 1]} : vector<4x96xf32> to vector<4x32xf32>
    %298 = arith.addf %297, %198 : vector<4x32xf32>
    %299 = arith.mulf %294, %298 : vector<4x32xf32>
    %300 = arith.addf %296, %299 : vector<4x32xf32>
    %301 = math.tanh %300 : vector<4x32xf32>
    %302 = arith.subf %283, %301 : vector<4x32xf32>
    %303 = arith.mulf %295, %302 : vector<4x32xf32>
    %304 = arith.addf %301, %303 : vector<4x32xf32>
    %c20_87 = arith.constant 20 : index
    %c0_88 = arith.constant 0 : index
    %305 = vector.load %arg16[%c20_87, %c0_88] : memref<32x96xf32, #tpu.memory_space<vmem>>, vector<4x96xf32>
    %cst_89 = arith.constant dense<0.000000e+00> : vector<4x96xf32>
    %306 = tpu.matmul %304, %195, %cst_89 {dimension_numbers = #tpu.dot_dimension_numbers<[1], [0], [0], [1], [0, 0, 1, 1], [], []>} : vector<4x32xf32>, vector<32x96xf32>, vector<4x96xf32> -> vector<4x96xf32>
    %307 = vector.extract_strided_slice %305 {offsets = [0, 0], sizes = [4, 64], strides = [1, 1]} : vector<4x96xf32> to vector<4x64xf32>
    %308 = vector.extract_strided_slice %306 {offsets = [0, 0], sizes = [4, 64], strides = [1, 1]} : vector<4x96xf32> to vector<4x64xf32>
    %309 = arith.addf %307, %308 : vector<4x64xf32>
    %310 = arith.negf %309 : vector<4x64xf32>
    %311 = math.exp %310 : vector<4x64xf32>
    %cst_90 = arith.constant 1.000000e+00 : f32
    %312 = vector.broadcast %cst_90 : f32 to vector<4x64xf32>
    %313 = arith.addf %312, %311 : vector<4x64xf32>
    %314 = arith.divf %312, %313 : vector<4x64xf32>
    %315 = vector.extract_strided_slice %314 {offsets = [0, 0], sizes = [4, 32], strides = [1, 1]} : vector<4x64xf32> to vector<4x32xf32>
    %316 = vector.extract_strided_slice %314 {offsets = [0, 32], sizes = [4, 32], strides = [1, 1]} : vector<4x64xf32> to vector<4x32xf32>
    %317 = vector.extract_strided_slice %305 {offsets = [0, 64], sizes = [4, 32], strides = [1, 1]} : vector<4x96xf32> to vector<4x32xf32>
    %318 = vector.extract_strided_slice %306 {offsets = [0, 64], sizes = [4, 32], strides = [1, 1]} : vector<4x96xf32> to vector<4x32xf32>
    %319 = arith.addf %318, %198 : vector<4x32xf32>
    %320 = arith.mulf %315, %319 : vector<4x32xf32>
    %321 = arith.addf %317, %320 : vector<4x32xf32>
    %322 = math.tanh %321 : vector<4x32xf32>
    %323 = arith.subf %304, %322 : vector<4x32xf32>
    %324 = arith.mulf %316, %323 : vector<4x32xf32>
    %325 = arith.addf %322, %324 : vector<4x32xf32>
    %c24_91 = arith.constant 24 : index
    %c0_92 = arith.constant 0 : index
    %326 = vector.load %arg16[%c24_91, %c0_92] : memref<32x96xf32, #tpu.memory_space<vmem>>, vector<4x96xf32>
    %cst_93 = arith.constant dense<0.000000e+00> : vector<4x96xf32>
    %327 = tpu.matmul %325, %195, %cst_93 {dimension_numbers = #tpu.dot_dimension_numbers<[1], [0], [0], [1], [0, 0, 1, 1], [], []>} : vector<4x32xf32>, vector<32x96xf32>, vector<4x96xf32> -> vector<4x96xf32>
    %328 = vector.extract_strided_slice %326 {offsets = [0, 0], sizes = [4, 64], strides = [1, 1]} : vector<4x96xf32> to vector<4x64xf32>
    %329 = vector.extract_strided_slice %327 {offsets = [0, 0], sizes = [4, 64], strides = [1, 1]} : vector<4x96xf32> to vector<4x64xf32>
    %330 = arith.addf %328, %329 : vector<4x64xf32>
    %331 = arith.negf %330 : vector<4x64xf32>
    %332 = math.exp %331 : vector<4x64xf32>
    %cst_94 = arith.constant 1.000000e+00 : f32
    %333 = vector.broadcast %cst_94 : f32 to vector<4x64xf32>
    %334 = arith.addf %333, %332 : vector<4x64xf32>
    %335 = arith.divf %333, %334 : vector<4x64xf32>
    %336 = vector.extract_strided_slice %335 {offsets = [0, 0], sizes = [4, 32], strides = [1, 1]} : vector<4x64xf32> to vector<4x32xf32>
    %337 = vector.extract_strided_slice %335 {offsets = [0, 32], sizes = [4, 32], strides = [1, 1]} : vector<4x64xf32> to vector<4x32xf32>
    %338 = vector.extract_strided_slice %326 {offsets = [0, 64], sizes = [4, 32], strides = [1, 1]} : vector<4x96xf32> to vector<4x32xf32>
    %339 = vector.extract_strided_slice %327 {offsets = [0, 64], sizes = [4, 32], strides = [1, 1]} : vector<4x96xf32> to vector<4x32xf32>
    %340 = arith.addf %339, %198 : vector<4x32xf32>
    %341 = arith.mulf %336, %340 : vector<4x32xf32>
    %342 = arith.addf %338, %341 : vector<4x32xf32>
    %343 = math.tanh %342 : vector<4x32xf32>
    %344 = arith.subf %325, %343 : vector<4x32xf32>
    %345 = arith.mulf %337, %344 : vector<4x32xf32>
    %346 = arith.addf %343, %345 : vector<4x32xf32>
    %c28_95 = arith.constant 28 : index
    %c0_96 = arith.constant 0 : index
    %347 = vector.load %arg16[%c28_95, %c0_96] : memref<32x96xf32, #tpu.memory_space<vmem>>, vector<4x96xf32>
    %cst_97 = arith.constant dense<0.000000e+00> : vector<4x96xf32>
    %348 = tpu.matmul %346, %195, %cst_97 {dimension_numbers = #tpu.dot_dimension_numbers<[1], [0], [0], [1], [0, 0, 1, 1], [], []>} : vector<4x32xf32>, vector<32x96xf32>, vector<4x96xf32> -> vector<4x96xf32>
    %349 = vector.extract_strided_slice %347 {offsets = [0, 0], sizes = [4, 64], strides = [1, 1]} : vector<4x96xf32> to vector<4x64xf32>
    %350 = vector.extract_strided_slice %348 {offsets = [0, 0], sizes = [4, 64], strides = [1, 1]} : vector<4x96xf32> to vector<4x64xf32>
    %351 = arith.addf %349, %350 : vector<4x64xf32>
    %352 = arith.negf %351 : vector<4x64xf32>
    %353 = math.exp %352 : vector<4x64xf32>
    %cst_98 = arith.constant 1.000000e+00 : f32
    %354 = vector.broadcast %cst_98 : f32 to vector<4x64xf32>
    %355 = arith.addf %354, %353 : vector<4x64xf32>
    %356 = arith.divf %354, %355 : vector<4x64xf32>
    %357 = vector.extract_strided_slice %356 {offsets = [0, 0], sizes = [4, 32], strides = [1, 1]} : vector<4x64xf32> to vector<4x32xf32>
    %358 = vector.extract_strided_slice %356 {offsets = [0, 32], sizes = [4, 32], strides = [1, 1]} : vector<4x64xf32> to vector<4x32xf32>
    %359 = vector.extract_strided_slice %347 {offsets = [0, 64], sizes = [4, 32], strides = [1, 1]} : vector<4x96xf32> to vector<4x32xf32>
    %360 = vector.extract_strided_slice %348 {offsets = [0, 64], sizes = [4, 32], strides = [1, 1]} : vector<4x96xf32> to vector<4x32xf32>
    %361 = arith.addf %360, %198 : vector<4x32xf32>
    %362 = arith.mulf %357, %361 : vector<4x32xf32>
    %363 = arith.addf %359, %362 : vector<4x32xf32>
    %364 = math.tanh %363 : vector<4x32xf32>
    %365 = arith.subf %346, %364 : vector<4x32xf32>
    %366 = arith.mulf %358, %365 : vector<4x32xf32>
    %367 = arith.addf %364, %366 : vector<4x32xf32>
    %c0_99 = arith.constant 0 : index
    %c0_100 = arith.constant 0 : index
    %368 = vector.load %arg10[%c0_99, %c0_100] : memref<32x64xf32, #tpu.memory_space<vmem>>, vector<32x64xf32>
    %cst_101 = arith.constant dense<0.000000e+00> : vector<4x64xf32>
    %369 = tpu.matmul %367, %368, %cst_101 {dimension_numbers = #tpu.dot_dimension_numbers<[1], [0], [0], [1], [0, 0, 1, 1], [], []>} : vector<4x32xf32>, vector<32x64xf32>, vector<4x64xf32> -> vector<4x64xf32>
    %c0_102 = arith.constant 0 : index
    %c0_103 = arith.constant 0 : index
    %370 = vector.load %arg9[%c0_102, %c0_103] : memref<4x8xf32, #tpu.memory_space<vmem>>, vector<4x8xf32>
    %c0_104 = arith.constant 0 : index
    %c0_105 = arith.constant 0 : index
    %371 = vector.load %arg11[%c0_104, %c0_105] : memref<8x64xf32, #tpu.memory_space<vmem>>, vector<8x64xf32>
    %cst_106 = arith.constant dense<0.000000e+00> : vector<4x64xf32>
    %372 = tpu.matmul %370, %371, %cst_106 {dimension_numbers = #tpu.dot_dimension_numbers<[1], [0], [0], [1], [0, 0, 1, 1], [], []>} : vector<4x8xf32>, vector<8x64xf32>, vector<4x64xf32> -> vector<4x64xf32>
    %373 = arith.addf %369, %372 : vector<4x64xf32>
    %c0_107 = arith.constant 0 : index
    %c0_108 = arith.constant 0 : index
    %374 = vector.load %arg12[%c0_107, %c0_108] : memref<1x64xf32, #tpu.memory_space<vmem>>, vector<1x64xf32>
    %375 = vector.broadcast %374 : vector<1x64xf32> to vector<4x64xf32>
    %376 = arith.addf %373, %375 : vector<4x64xf32>
    %cst_109 = arith.constant 0.000000e+00 : f32
    %377 = vector.broadcast %cst_109 : f32 to vector<4x64xf32>
    %378 = arith.maximumf %376, %377 : vector<4x64xf32>
    %c0_110 = arith.constant 0 : index
    %c0_111 = arith.constant 0 : index
    %379 = vector.load %arg13[%c0_110, %c0_111] : memref<64x2xf32, #tpu.memory_space<vmem>>, vector<64x2xf32>
    %cst_112 = arith.constant dense<0.000000e+00> : vector<4x2xf32>
    %380 = tpu.matmul %378, %379, %cst_112 {dimension_numbers = #tpu.dot_dimension_numbers<[1], [0], [0], [1], [0, 0, 1, 1], [], []>} : vector<4x64xf32>, vector<64x2xf32>, vector<4x2xf32> -> vector<4x2xf32>
    %c0_113 = arith.constant 0 : index
    %c0_114 = arith.constant 0 : index
    %381 = vector.load %arg14[%c0_113, %c0_114] : memref<1x2xf32, #tpu.memory_space<vmem>>, vector<1x2xf32>
    %382 = vector.broadcast %381 : vector<1x2xf32> to vector<4x2xf32>
    %383 = arith.addf %380, %382 : vector<4x2xf32>
    %c0_115 = arith.constant 0 : index
    %c0_116 = arith.constant 0 : index
    %384 = vector.load %arg15[%c0_115, %c0_116] : memref<4x2xf32, #tpu.memory_space<vmem>>, vector<4x2xf32>
    tpu.vector_store %arg15[%c0_115, %c0_116], %383 {strides = array<i32>} : memref<4x2xf32, #tpu.memory_space<vmem>>, vector<4x2xf32>,
    return
  }
}

</mosaic_0001>

<llo_original>
// kernel: tpu_custom_call.1
$region0: #{tpu_custom_call.1}
  #allocation0 [shape = 'u32[]', space=smem, size = 0x4, offset = 0x4, fixed_abs, tag = 'smem constant byte address 0x4 - core index']
  #allocation1 [shape = 'u32[144,128]{1,0:T(1,128)}', space=vmem, size = 0x12000, scoped, tag = 'internal scratch']
  #allocation2 [shape = 'f32[32,96]{1,0:T(8,128)}', space=vmem, size = 0x4000, scoped, tag = 'scratch operand']
  #allocation3 [shape = 'f32[32,32]{1,0:T(8,128)}', space=vmem, size = 0x4000, scoped, tag = 'scratch operand']
  %s0 = inlined_call_operand.vmem [shape: f32[32,16], index: 0, kind: input, shape index: {}]
  %s1 = inlined_call_operand.hbm [shape: f32[16,96], index: 1, kind: input, shape index: {}]
  %s2 = inlined_call_operand.vmem [shape: f32[32,96], index: 2, kind: input, shape index: {}]
  %s3 = inlined_call_operand.hbm [shape: f32[1,96], index: 3, kind: input, shape index: {}]
  %s4 = inlined_call_operand.hbm [shape: f32[1,32], index: 4, kind: input, shape index: {}]
  %s5 = inlined_call_operand.vmem [shape: f32[32,96], index: 5, kind: input, shape index: {}]
  %s6 = inlined_call_operand.vmem [shape: f32[32,96], index: 6, kind: input, shape index: {}]
  %s7 = inlined_call_operand.hbm [shape: f32[1,96], index: 7, kind: input, shape index: {}]
  %s8 = inlined_call_operand.vmem [shape: f32[1,32], index: 8, kind: input, shape index: {}]
  %s9 = inlined_call_operand.vmem [shape: f32[4,8], index: 9, kind: input, shape index: {}]
  %s10 = inlined_call_operand.vmem [shape: f32[32,64], index: 10, kind: input, shape index: {}]
  %s11 = inlined_call_operand.vmem [shape: f32[8,64], index: 11, kind: input, shape index: {}]
  %s12 = inlined_call_operand.vmem [shape: f32[1,64], index: 12, kind: input, shape index: {}]
  %s13 = inlined_call_operand.vmem [shape: f32[64,2], index: 13, kind: input, shape index: {}]
  %s14 = inlined_call_operand.vmem [shape: f32[1,2], index: 14, kind: input, shape index: {}]
  %s15 = inlined_call_operand.vmem [shape: f32[4,2], index: 15, kind: output, shape index: {}]
  %s16 = sld [smem:[#allocation0]]
  $region86: #{tpu_custom_call.1} parent=0
    _
  %s18 = ssub.s32 1, %s16
  %s19 = scalar_select 0, %s18, %s16
  $region1: #{tpu_custom_call.1} parent=0
    #allocation4 [shape = 'u8[8192]{0}', space=vmem, size = 0x2000, scoped, tag = 'input window, operand 1, single buffered']
    #allocation5 [shape = 's32[1]{0}', space=sflag, size = 0x4, scoped, tag = 'scoped memory for tpu_custom_call.1']
    #allocation6 [shape = 'u8[512]{0}', space=vmem, size = 0x400, scoped, tag = 'input window, operand 3, single buffered']
    #allocation7 [shape = 's32[1]{0}', space=sflag, size = 0x4, scoped, tag = 'scoped memory for tpu_custom_call.1']
    #allocation8 [shape = 'u8[512]{0}', space=vmem, size = 0x400, scoped, tag = 'input window, operand 4, single buffered']
    #allocation9 [shape = 'u8[512]{0}', space=vmem, size = 0x400, scoped, tag = 'input window, operand 7, single buffered']
    #allocation10 [shape = 's32[1]{0}', space=sflag, size = 0x4, scoped, tag = 'scoped memory for tpu_custom_call.1']
    %20 = vsyncpa [#allocation5], 0
    %21 = vsyncpa [#allocation7], 0
    %22 = vsyncpa [#allocation10], 0
    // Predicated region
    $region2: #{tpu_custom_call.1} parent=1 // pred_check
      _
    $region3: #{tpu_custom_call.1} parent=1 // pred_check_branch
      %24 = sbr.rel (0) target = $region5
    $region4: #{tpu_custom_call.1} parent=1 // pred_region
      _
    $region5: #{tpu_custom_call.1} parent=1 // pred_fallthru
      _
    // Predicated region
    $region6: #{tpu_custom_call.1} parent=1 // pred_check
      _
    $region7: #{tpu_custom_call.1} parent=1 // pred_check_branch
      %26 = sbr.rel (0) target = $region9
    $region8: #{tpu_custom_call.1} parent=1 // pred_region
      %s28 = ssub.s32 256, 256
      %29 = vsyncadd [#allocation5], %s28
      %s30 = sshll.u32 [#allocation4], 4
      %s31 = int_to_ptr.vmem [resolvable:$true] %s30
      %36 = dma.hbm_to_vmem [thread:$0]  %s1, 256, %s31, [#allocation5], 128, 128, 8
    $region9: #{tpu_custom_call.1} parent=1 // pred_fallthru
      _
    // Predicated region
    $region10: #{tpu_custom_call.1} parent=1 // pred_check
      _
    $region11: #{tpu_custom_call.1} parent=1 // pred_check_branch
      %38 = sbr.rel (0) target = $region13
    $region12: #{tpu_custom_call.1} parent=1 // pred_region
      _
    $region13: #{tpu_custom_call.1} parent=1 // pred_fallthru
      _
    // Predicated region
    $region14: #{tpu_custom_call.1} parent=1 // pred_check
      _
    $region15: #{tpu_custom_call.1} parent=1 // pred_check_branch
      %40 = sbr.rel (0) target = $region17
    $region16: #{tpu_custom_call.1} parent=1 // pred_region
      %s42 = ssub.s32 16, 16
      %43 = vsyncadd [#allocation7], %s42
      %s45 = sshll.u32 [#allocation6], 4
      %s46 = int_to_ptr.vmem [resolvable:$true] %s45
      %48 = dma.hbm_to_vmem [thread:$0]  %s3, 16, %s46, [#allocation7]
    $region17: #{tpu_custom_call.1} parent=1 // pred_fallthru
      _
    // Predicated region
    $region18: #{tpu_custom_call.1} parent=1 // pred_check
      _
    $region19: #{tpu_custom_call.1} parent=1 // pred_check_branch
      %50 = sbr.rel (0) target = $region21
    $region20: #{tpu_custom_call.1} parent=1 // pred_region
      %s52 = ssub.s32 16, 16
      %53 = vsyncadd [#allocation7], %s52
      %s55 = sshll.u32 [#allocation8], 4
      %s56 = int_to_ptr.vmem [resolvable:$true] %s55
      %58 = dma.hbm_to_vmem [thread:$0]  %s4, 16, %s56, [#allocation7]
    $region21: #{tpu_custom_call.1} parent=1 // pred_fallthru
      _
    // Predicated region
    $region22: #{tpu_custom_call.1} parent=1 // pred_check
      _
    $region23: #{tpu_custom_call.1} parent=1 // pred_check_branch
      %60 = sbr.rel (0) target = $region25
    $region24: #{tpu_custom_call.1} parent=1 // pred_region
      _
    $region25: #{tpu_custom_call.1} parent=1 // pred_fallthru
      _
    // Predicated region
    $region26: #{tpu_custom_call.1} parent=1 // pred_check
      _
    $region27: #{tpu_custom_call.1} parent=1 // pred_check_branch
      %62 = sbr.rel (0) target = $region29
    $region28: #{tpu_custom_call.1} parent=1 // pred_region
      _
    $region29: #{tpu_custom_call.1} parent=1 // pred_fallthru
      _
    // Predicated region
    $region30: #{tpu_custom_call.1} parent=1 // pred_check
      _
    $region31: #{tpu_custom_call.1} parent=1 // pred_check_branch
      %64 = sbr.rel (0) target = $region33
    $region32: #{tpu_custom_call.1} parent=1 // pred_region
      %s66 = ssub.s32 16, 16
      %67 = vsyncadd [#allocation10], %s66
      %s69 = sshll.u32 [#allocation9], 4
      %s70 = int_to_ptr.vmem [resolvable:$true] %s69
      %72 = dma.hbm_to_vmem [thread:$0]  %s7, 16, %s70, [#allocation10]
    $region33: #{tpu_custom_call.1} parent=1 // pred_fallthru
      _
    // Predicated region
    $region34: #{tpu_custom_call.1} parent=1 // pred_check
      _
    $region35: #{tpu_custom_call.1} parent=1 // pred_check_branch
      %74 = sbr.rel (0) target = $region37
    $region36: #{tpu_custom_call.1} parent=1 // pred_region
      _
    $region37: #{tpu_custom_call.1} parent=1 // pred_fallthru
      _
    // Predicated region
    $region38: #{tpu_custom_call.1} parent=1 // pred_check
      _
    $region39: #{tpu_custom_call.1} parent=1 // pred_check_branch
      %76 = sbr.rel (0) target = $region41
    $region40: #{tpu_custom_call.1} parent=1 // pred_region
      _
    $region41: #{tpu_custom_call.1} parent=1 // pred_fallthru
      _
    // Predicated region
    $region42: #{tpu_custom_call.1} parent=1 // pred_check
      _
    $region43: #{tpu_custom_call.1} parent=1 // pred_check_branch
      %78 = sbr.rel (0) target = $region45
    $region44: #{tpu_custom_call.1} parent=1 // pred_region
      _
    $region45: #{tpu_custom_call.1} parent=1 // pred_fallthru
      _
    // Predicated region
    $region46: #{tpu_custom_call.1} parent=1 // pred_check
      _
    $region47: #{tpu_custom_call.1} parent=1 // pred_check_branch
      %80 = sbr.rel (0) target = $region49
    $region48: #{tpu_custom_call.1} parent=1 // pred_region
      _
    $region49: #{tpu_custom_call.1} parent=1 // pred_fallthru
      _
    // Predicated region
    $region50: #{tpu_custom_call.1} parent=1 // pred_check
      _
    $region51: #{tpu_custom_call.1} parent=1 // pred_check_branch
      %82 = sbr.rel (0) target = $region53
    $region52: #{tpu_custom_call.1} parent=1 // pred_region
      _
    $region53: #{tpu_custom_call.1} parent=1 // pred_fallthru
      _
    // Predicated region
    $region54: #{tpu_custom_call.1} parent=1 // pred_check
      _
    $region55: #{tpu_custom_call.1} parent=1 // pred_check_branch
      %84 = sbr.rel (0) target = $region57
    $region56: #{tpu_custom_call.1} parent=1 // pred_region
      _
    $region57: #{tpu_custom_call.1} parent=1 // pred_fallthru
      _
    // Predicated region
    $region58: #{tpu_custom_call.1} parent=1 // pred_check
      _
    $region59: #{tpu_custom_call.1} parent=1 // pred_check_branch
      %86 = sbr.rel (0) target = $region61
    $region60: #{tpu_custom_call.1} parent=1 // pred_region
      _
    $region61: #{tpu_custom_call.1} parent=1 // pred_fallthru
      _
    // Predicated region
    $region62: #{tpu_custom_call.1} parent=1 // pred_check
      _
    $region63: #{tpu_custom_call.1} parent=1 // pred_check_branch
      %88 = sbr.rel (0) target = $region65
    $region64: #{tpu_custom_call.1} parent=1 // pred_region
      %89 = dma.done [#allocation5], 256
    $region65: #{tpu_custom_call.1} parent=1 // pred_fallthru
      _
    // Predicated region
    $region66: #{tpu_custom_call.1} parent=1 // pred_check
      _
    $region67: #{tpu_custom_call.1} parent=1 // pred_check_branch
      %91 = sbr.rel (0) target = $region69
    $region68: #{tpu_custom_call.1} parent=1 // pred_region
      %92 = dma.done [#allocation7], 16
    $region69: #{tpu_custom_call.1} parent=1 // pred_fallthru
      _
    // Predicated region
    $region70: #{tpu_custom_call.1} parent=1 // pred_check
      _
    $region71: #{tpu_custom_call.1} parent=1 // pred_check_branch
      %94 = sbr.rel (0) target = $region73
    $region72: #{tpu_custom_call.1} parent=1 // pred_region
      %95 = dma.done [#allocation7], 16
    $region73: #{tpu_custom_call.1} parent=1 // pred_fallthru
      _
    // Predicated region
    $region74: #{tpu_custom_call.1} parent=1 // pred_check
      _
    $region75: #{tpu_custom_call.1} parent=1 // pred_check_branch
      %97 = sbr.rel (0) target = $region77
    $region76: #{tpu_custom_call.1} parent=1 // pred_region
      %98 = dma.done [#allocation10], 16
    $region77: #{tpu_custom_call.1} parent=1 // pred_fallthru
      _
    %v99 = vld [vmem:[%s0] sm:$0xff]
    %v100 = vld [vmem:[%s0 + $0x8] sm:$0xff]
    %v101 = vld [vmem:[%s0 + $0x10] sm:$0xff]
    %v102 = vld [vmem:[%s0 + $0x18] sm:$0xff]
    %v103 = vld [vmem:[#allocation4] sm:$0xff]
    %v104 = vld [vmem:[#allocation4 + $0x8] sm:$0xff]
    %v105 = vld [vmem:[#allocation6] sm:$0x1]
    %v107 = vlaneseq
    %v108 = vshrl.u32 %v107, 7
    %v109 = vsub.s32 0, %v108
    %v110 = vrot.slane %v105, %v109
    %vm112 = vcmask 130048
    %v114 = vsel %vm112, %v99, 0
    %v117 = vsel %vm112, %v100, 0
    %v120 = vsel %vm112, %v101, 0
    %v123 = vsel %vm112, %v102, 0
    %125 = vmatprep.subr.mxu0 0.0
    %126 = vmatpush1.msra.mxu0 %v103
    %127 = vmatprep.subr.mxu0 0.0
    %128 = vmatpush1.msra.mxu0 %v104
    %129 = vmatprep.subr.mxu0 0.0
    %130 = vmatpush1.msra.mxu0 0.0
    %131 = vmatprep.subr.mxu0 0.0
    %132 = vmatpush1.msra.mxu0 0.0
    %133 = vmatprep.subr.mxu0 0.0
    %134 = vmatpush1.msra.mxu0 0.0
    %135 = vmatprep.subr.mxu0 0.0
    %136 = vmatpush1.msra.mxu0 0.0
    %137 = vmatprep.subr.mxu0 0.0
    %138 = vmatpush1.msra.mxu0 0.0
    %139 = vmatprep.subr.mxu0 0.0
    %140 = vmatpush1.msra.mxu0 0.0
    %141 = vmatprep.subr.mxu0 0.0
    %142 = vmatpush1.msra.mxu0 0.0
    %143 = vmatprep.subr.mxu0 0.0
    %144 = vmatpush1.msra.mxu0 0.0
    %145 = vmatprep.subr.mxu0 0.0
    %146 = vmatpush1.msra.mxu0 0.0
    %147 = vmatprep.subr.mxu0 0.0
    %148 = vmatpush1.msra.mxu0 0.0
    %149 = vmatprep.subr.mxu0 0.0
    %150 = vmatpush1.msra.mxu0 0.0
    %151 = vmatprep.subr.mxu0 0.0
    %152 = vmatpush1.msra.mxu0 0.0
    %153 = vmatprep.subr.mxu0 0.0
    %154 = vmatpush1.msra.mxu0 0.0
    %155 = vmatprep.subr.mxu0 0.0
    %156 = vmatpush1.msra.mxu0 0.0
    %157 = vmatprep.subr.mxu0 0.0
    %158 = vmatpush1.msra.mxu0 0.0
    %159 = vmatprep.subr.mxu0 0.0
    %160 = vmatpush1.msra.mxu0 0.0
    %161 = vmatprep.subr.mxu0 0.0
    %162 = vmatpush1.msra.mxu0 0.0
    %163 = vmatprep.subr.mxu0 0.0
    %164 = vmatpush1.msra.mxu0 0.0
    %165 = vmatprep.subr.mxu0 0.0
    %166 = vmatpush1.msra.mxu0 0.0
    %167 = vmatprep.subr.mxu0 0.0
    %168 = vmatpush1.msra.mxu0 0.0
    %169 = vmatprep.subr.mxu0 0.0
    %170 = vmatpush1.msra.mxu0 0.0
    %171 = vmatprep.subr.mxu0 0.0
    %172 = vmatpush1.msra.mxu0 0.0
    %173 = vmatprep.subr.mxu0 0.0
    %174 = vmatpush1.msra.mxu0 0.0
    %175 = vmatprep.subr.mxu0 0.0
    %176 = vmatpush1.msra.mxu0 0.0
    %177 = vmatprep.subr.mxu0 0.0
    %178 = vmatpush1.msra.mxu0 0.0
    %179 = vmatprep.subr.mxu0 0.0
    %180 = vmatpush1.msra.mxu0 0.0
    %181 = vmatprep.subr.mxu0 0.0
    %182 = vmatpush1.msra.mxu0 0.0
    %183 = vmatprep.subr.mxu0 0.0
    %184 = vmatpush1.msra.mxu0 0.0
    %185 = vmatprep.subr.mxu0 0.0
    %186 = vmatpush1.msra.mxu0 0.0
    %187 = vmatprep.subr.mxu0 0.0
    %188 = vmatpush1.msra.mxu0 0.0
    %189 = vmatprep.mubr.f32.mxu0 0.0
    %190 = vmatmul.mubr.f32.gmra.mrb[0].mxu0 %v114
    %v191 = vpop.f32.mrb[0].mxu0
    %v192 = vadd.f32 %v110, %v191
    %v193 = vpop.f32.mrb[0].mxu0
    %194 = vmatprep.mubr.f32.mxu0 0.0
    %195 = vmatmul.mubr.f32.gmra.mrb[0].mxu0 %v117
    %v196 = vpop.f32.mrb[0].mxu0
    %v197 = vadd.f32 %v110, %v196
    %v198 = vpop.f32.mrb[0].mxu0
    %199 = vmatprep.mubr.f32.mxu0 0.0
    %200 = vmatmul.mubr.f32.gmra.mrb[0].mxu0 %v120
    %v201 = vpop.f32.mrb[0].mxu0
    %v202 = vadd.f32 %v110, %v201
    %v203 = vpop.f32.mrb[0].mxu0
    %204 = vmatprep.mubr.f32.mxu0 0.0
    %205 = vmatmul.mubr.f32.gmra.mrb[0].mxu0 %v123
    %v206 = vpop.f32.mrb[0].mxu0
    %v207 = vadd.f32 %v110, %v206
    %v208 = vpop.f32.mrb[0].mxu0
    %209 = vdwg.mxu0
    %vm210 = vcmask 785408
    %211 = vst.msk [vmem:[#allocation2] sm:$0xff] %vm210, %v192
    %212 = vst.msk [vmem:[#allocation2 + $0x8] sm:$0xff] %vm210, %v197
    %213 = vst.msk [vmem:[#allocation2 + $0x10] sm:$0xff] %vm210, %v202
    %214 = vst.msk [vmem:[#allocation2 + $0x18] sm:$0xff] %vm210, %v207
    %v215 = vld [vmem:[%s2] sm:$0xff]
    %v216 = vld [vmem:[%s2 + $0x8] sm:$0xff]
    %v217 = vld [vmem:[%s2 + $0x10] sm:$0xff]
    %v218 = vld [vmem:[%s2 + $0x18] sm:$0xff]
    %v219 = vld [vmem:[#allocation8] sm:$0x1]
    %v221 = vlaneseq
    %v222 = vshrl.u32 %v221, 7
    %v223 = vsub.s32 0, %v222
    %v224 = vrot.slane %v219, %v223
    %v225 = vld [vmem:[#allocation2] sm:$0xf]
    %vm226 = vcmask 261120
    %v228 = vsel %vm226, 0.0, 0
    %230 = vmatprep.subr.mxu0 0.0
    %231 = vmatpush1.msra.mxu0 %v215
    %232 = vmatprep.subr.mxu0 0.0
    %233 = vmatpush1.msra.mxu0 %v216
    %234 = vmatprep.subr.mxu0 0.0
    %235 = vmatpush1.msra.mxu0 %v217
    %236 = vmatprep.subr.mxu0 0.0
    %237 = vmatpush1.msra.mxu0 %v218
    %238 = vmatprep.subr.mxu0 0.0
    %239 = vmatpush1.msra.mxu0 0.0
    %240 = vmatprep.subr.mxu0 0.0
    %241 = vmatpush1.msra.mxu0 0.0
    %242 = vmatprep.subr.mxu0 0.0
    %243 = vmatpush1.msra.mxu0 0.0
    %244 = vmatprep.subr.mxu0 0.0
    %245 = vmatpush1.msra.mxu0 0.0
    %246 = vmatprep.subr.mxu0 0.0
    %247 = vmatpush1.msra.mxu0 0.0
    %248 = vmatprep.subr.mxu0 0.0
    %249 = vmatpush1.msra.mxu0 0.0
    %250 = vmatprep.subr.mxu0 0.0
    %251 = vmatpush1.msra.mxu0 0.0
    %252 = vmatprep.subr.mxu0 0.0
    %253 = vmatpush1.msra.mxu0 0.0
    %254 = vmatprep.subr.mxu0 0.0
    %255 = vmatpush1.msra.mxu0 0.0
    %256 = vmatprep.subr.mxu0 0.0
    %257 = vmatpush1.msra.mxu0 0.0
    %258 = vmatprep.subr.mxu0 0.0
    %259 = vmatpush1.msra.mxu0 0.0
    %260 = vmatprep.subr.mxu0 0.0
    %261 = vmatpush1.msra.mxu0 0.0
    %262 = vmatprep.subr.mxu0 0.0
    %263 = vmatpush1.msra.mxu0 0.0
    %264 = vmatprep.subr.mxu0 0.0
    %265 = vmatpush1.msra.mxu0 0.0
    %266 = vmatprep.subr.mxu0 0.0
    %267 = vmatpush1.msra.mxu0 0.0
    %268 = vmatprep.subr.mxu0 0.0
    %269 = vmatpush1.msra.mxu0 0.0
    %270 = vmatprep.subr.mxu0 0.0
    %271 = vmatpush1.msra.mxu0 0.0
    %272 = vmatprep.subr.mxu0 0.0
    %273 = vmatpush1.msra.mxu0 0.0
    %274 = vmatprep.subr.mxu0 0.0
    %275 = vmatpush1.msra.mxu0 0.0
    %276 = vmatprep.subr.mxu0 0.0
    %277 = vmatpush1.msra.mxu0 0.0
    %278 = vmatprep.subr.mxu0 0.0
    %279 = vmatpush1.msra.mxu0 0.0
    %280 = vmatprep.subr.mxu0 0.0
    %281 = vmatpush1.msra.mxu0 0.0
    %282 = vmatprep.subr.mxu0 0.0
    %283 = vmatpush1.msra.mxu0 0.0
    %284 = vmatprep.subr.mxu0 0.0
    %285 = vmatpush1.msra.mxu0 0.0
    %286 = vmatprep.subr.mxu0 0.0
    %287 = vmatpush1.msra.mxu0 0.0
    %288 = vmatprep.subr.mxu0 0.0
    %289 = vmatpush1.msra.mxu0 0.0
    %290 = vmatprep.subr.mxu0 0.0
    %291 = vmatpush1.msra.mxu0 0.0
    %292 = vmatprep.subr.mxu0 0.0
    %293 = vmatpush1.msra.mxu0 0.0
    %294 = vmatprep.mubr.f32.mxu0 0.0
    %295 = vmatmul.mubr.f32.gmra.mrb[0].mxu0 %v228
    %v296 = vpop.f32.mrb[0].mxu0
    %v297 = vadd.f32 0.0, %v296
    %v298 = vpop.f32.mrb[0].mxu0
    %299 = vdwg.mxu0
    %v300 = vadd.f32 %v225, %v297
    %v301 = vxor.u32 %v300, 2147483648
    %v302 = vmul.f32 %v301, 1.442695
    %v303 = vpow.pop %v302
    %v304 = vadd.f32 %v303, 1.0
    %v305 = vrcp.pop %v304
    %v306 = vmul.f32 1.0, %v305
    %307 = vrot.lane.b32.xlu0 %v224, 64
    %v308 = vpop.permute.xlu0 %307
    %v310 = vadd.f32 %v297, %v308
    %312 = vrot.lane.b32.xlu0 %v310, 64
    %v313 = vpop.permute.xlu0 %312
    %v315 = vmul.f32 %v306, %v313
    %317 = vrot.lane.b32.xlu0 %v315, 64
    %v318 = vpop.permute.xlu0 %317
    %v320 = vadd.f32 %v225, %v318
    %v321 = vtanh.pop %v320
    %v322 = vsub.f32 0.0, %v321
    %324 = vrot.lane.b32.xlu0 %v322, 96
    %v325 = vpop.permute.xlu0 %324
    %v327 = vmul.f32 %v306, %v325
    %329 = vrot.lane.b32.xlu0 %v327, 32
    %v330 = vpop.permute.xlu0 %329
    %v332 = vadd.f32 %v321, %v330
    %334 = vrot.lane.b32.xlu0 %v332, 64
    %v335 = vpop.permute.xlu0 %334
    %vm337 = vcmask 257024
    %338 = vst.msk [vmem:[#allocation3] sm:$0xf] %vm337, %v335
    %v339 = vld [vmem:[#allocation2 + $0x4] sm:$0xf]
    %v340 = vsel %vm226, %v335, 0
    %342 = vmatprep.subr.mxu0 0.0
    %343 = vmatpush1.msra.mxu0 %v215
    %344 = vmatprep.subr.mxu0 0.0
    %345 = vmatpush1.msra.mxu0 %v216
    %346 = vmatprep.subr.mxu0 0.0
    %347 = vmatpush1.msra.mxu0 %v217
    %348 = vmatprep.subr.mxu0 0.0
    %349 = vmatpush1.msra.mxu0 %v218
    %350 = vmatprep.subr.mxu0 0.0
    %351 = vmatpush1.msra.mxu0 0.0
    %352 = vmatprep.subr.mxu0 0.0
    %353 = vmatpush1.msra.mxu0 0.0
    %354 = vmatprep.subr.mxu0 0.0
    %355 = vmatpush1.msra.mxu0 0.0
    %356 = vmatprep.subr.mxu0 0.0
    %357 = vmatpush1.msra.mxu0 0.0
    %358 = vmatprep.subr.mxu0 0.0
    %359 = vmatpush1.msra.mxu0 0.0
    %360 = vmatprep.subr.mxu0 0.0
    %361 = vmatpush1.msra.mxu0 0.0
    %362 = vmatprep.subr.mxu0 0.0
    %363 = vmatpush1.msra.mxu0 0.0
    %364 = vmatprep.subr.mxu0 0.0
    %365 = vmatpush1.msra.mxu0 0.0
    %366 = vmatprep.subr.mxu0 0.0
    %367 = vmatpush1.msra.mxu0 0.0
    %368 = vmatprep.subr.mxu0 0.0
    %369 = vmatpush1.msra.mxu0 0.0
    %370 = vmatprep.subr.mxu0 0.0
    %371 = vmatpush1.msra.mxu0 0.0
    %372 = vmatprep.subr.mxu0 0.0
    %373 = vmatpush1.msra.mxu0 0.0
    %374 = vmatprep.subr.mxu0 0.0
    %375 = vmatpush1.msra.mxu0 0.0
    %376 = vmatprep.subr.mxu0 0.0
    %377 = vmatpush1.msra.mxu0 0.0
    %378 = vmatprep.subr.mxu0 0.0
    %379 = vmatpush1.msra.mxu0 0.0
    %380 = vmatprep.subr.mxu0 0.0
    %381 = vmatpush1.msra.mxu0 0.0
    %382 = vmatprep.subr.mxu0 0.0
    %383 = vmatpush1.msra.mxu0 0.0
    %384 = vmatprep.subr.mxu0 0.0
    %385 = vmatpush1.msra.mxu0 0.0
    %386 = vmatprep.subr.mxu0 0.0
    %387 = vmatpush1.msra.mxu0 0.0
    %388 = vmatprep.subr.mxu0 0.0
    %389 = vmatpush1.msra.mxu0 0.0
    %390 = vmatprep.subr.mxu0 0.0
    %391 = vmatpush1.msra.mxu0 0.0
    %392 = vmatprep.subr.mxu0 0.0
    %393 = vmatpush1.msra.mxu0 0.0
    %394 = vmatprep.subr.mxu0 0.0
    %395 = vmatpush1.msra.mxu0 0.0
    %396 = vmatprep.subr.mxu0 0.0
    %397 = vmatpush1.msra.mxu0 0.0
    %398 = vmatprep.subr.mxu0 0.0
    %399 = vmatpush1.msra.mxu0 0.0
    %400 = vmatprep.subr.mxu0 0.0
    %401 = vmatpush1.msra.mxu0 0.0
    %402 = vmatprep.subr.mxu0 0.0
    %403 = vmatpush1.msra.mxu0 0.0
    %404 = vmatprep.subr.mxu0 0.0
    %405 = vmatpush1.msra.mxu0 0.0
    %406 = vmatprep.mubr.f32.mxu0 0.0
    %407 = vmatmul.mubr.f32.gmra.mrb[0].mxu0 %v340
    %v408 = vpop.f32.mrb[0].mxu0
    %v409 = vadd.f32 0.0, %v408
    %v410 = vpop.f32.mrb[0].mxu0
    %411 = vdwg.mxu0
    %v412 = vadd.f32 %v339, %v409
    %v413 = vxor.u32 %v412, 2147483648
    %v414 = vmul.f32 %v413, 1.442695
    %v415 = vpow.pop %v414
    %v416 = vadd.f32 %v415, 1.0
    %v417 = vrcp.pop %v416
    %v418 = vmul.f32 1.0, %v417
    %v419 = vadd.f32 %v409, %v308
    %421 = vrot.lane.b32.xlu0 %v419, 64
    %v422 = vpop.permute.xlu0 %421
    %v424 = vmul.f32 %v418, %v422
    %426 = vrot.lane.b32.xlu0 %v424, 64
    %v427 = vpop.permute.xlu0 %426
    %v429 = vadd.f32 %v339, %v427
    %v430 = vtanh.pop %v429
    %v431 = vsub.f32 %v332, %v430
    %433 = vrot.lane.b32.xlu0 %v431, 96
    %v434 = vpop.permute.xlu0 %433
    %v436 = vmul.f32 %v418, %v434
    %438 = vrot.lane.b32.xlu0 %v436, 32
    %v439 = vpop.permute.xlu0 %438
    %v441 = vadd.f32 %v430, %v439
    %443 = vrot.lane.b32.xlu0 %v441, 64
    %v444 = vpop.permute.xlu0 %443
    %446 = vst.msk [vmem:[#allocation3 + $0x4] sm:$0xf] %vm337, %v444
    %v447 = vld [vmem:[#allocation2 + $0x8] sm:$0xf]
    %v448 = vsel %vm226, %v444, 0
    %450 = vmatprep.subr.mxu0 0.0
    %451 = vmatpush1.msra.mxu0 %v215
    %452 = vmatprep.subr.mxu0 0.0
    %453 = vmatpush1.msra.mxu0 %v216
    %454 = vmatprep.subr.mxu0 0.0
    %455 = vmatpush1.msra.mxu0 %v217
    %456 = vmatprep.subr.mxu0 0.0
    %457 = vmatpush1.msra.mxu0 %v218
    %458 = vmatprep.subr.mxu0 0.0
    %459 = vmatpush1.msra.mxu0 0.0
    %460 = vmatprep.subr.mxu0 0.0
    %461 = vmatpush1.msra.mxu0 0.0
    %462 = vmatprep.subr.mxu0 0.0
    %463 = vmatpush1.msra.mxu0 0.0
    %464 = vmatprep.subr.mxu0 0.0
    %465 = vmatpush1.msra.mxu0 0.0
    %466 = vmatprep.subr.mxu0 0.0
    %467 = vmatpush1.msra.mxu0 0.0
    %468 = vmatprep.subr.mxu0 0.0
    %469 = vmatpush1.msra.mxu0 0.0
    %470 = vmatprep.subr.mxu0 0.0
    %471 = vmatpush1.msra.mxu0 0.0
    %472 = vmatprep.subr.mxu0 0.0
    %473 = vmatpush1.msra.mxu0 0.0
    %474 = vmatprep.subr.mxu0 0.0
    %475 = vmatpush1.msra.mxu0 0.0
    %476 = vmatprep.subr.mxu0 0.0
    %477 = vmatpush1.msra.mxu0 0.0
    %478 = vmatprep.subr.mxu0 0.0
    %479 = vmatpush1.msra.mxu0 0.0
    %480 = vmatprep.subr.mxu0 0.0
    %481 = vmatpush1.msra.mxu0 0.0
    %482 = vmatprep.subr.mxu0 0.0
    %483 = vmatpush1.msra.mxu0 0.0
    %484 = vmatprep.subr.mxu0 0.0
    %485 = vmatpush1.msra.mxu0 0.0
    %486 = vmatprep.subr.mxu0 0.0
    %487 = vmatpush1.msra.mxu0 0.0
    %488 = vmatprep.subr.mxu0 0.0
    %489 = vmatpush1.msra.mxu0 0.0
    %490 = vmatprep.subr.mxu0 0.0
    %491 = vmatpush1.msra.mxu0 0.0
    %492 = vmatprep.subr.mxu0 0.0
    %493 = vmatpush1.msra.mxu0 0.0
    %494 = vmatprep.subr.mxu0 0.0
    %495 = vmatpush1.msra.mxu0 0.0
    %496 = vmatprep.subr.mxu0 0.0
    %497 = vmatpush1.msra.mxu0 0.0
    %498 = vmatprep.subr.mxu0 0.0
    %499 = vmatpush1.msra.mxu0 0.0
    %500 = vmatprep.subr.mxu0 0.0
    %501 = vmatpush1.msra.mxu0 0.0
    %502 = vmatprep.subr.mxu0 0.0
    %503 = vmatpush1.msra.mxu0 0.0
    %504 = vmatprep.subr.mxu0 0.0
    %505 = vmatpush1.msra.mxu0 0.0
    %506 = vmatprep.subr.mxu0 0.0
    %507 = vmatpush1.msra.mxu0 0.0
    %508 = vmatprep.subr.mxu0 0.0
    %509 = vmatpush1.msra.mxu0 0.0
    %510 = vmatprep.subr.mxu0 0.0
    %511 = vmatpush1.msra.mxu0 0.0
    %512 = vmatprep.subr.mxu0 0.0
    %513 = vmatpush1.msra.mxu0 0.0
    %514 = vmatprep.mubr.f32.mxu0 0.0
    %515 = vmatmul.mubr.f32.gmra.mrb[0].mxu0 %v448
    %v516 = vpop.f32.mrb[0].mxu0
    %v517 = vadd.f32 0.0, %v516
    %v518 = vpop.f32.mrb[0].mxu0
    %519 = vdwg.mxu0
    %v520 = vadd.f32 %v447, %v517
    %v521 = vxor.u32 %v520, 2147483648
    %v522 = vmul.f32 %v521, 1.442695
    %v523 = vpow.pop %v522
    %v524 = vadd.f32 %v523, 1.0
    %v525 = vrcp.pop %v524
    %v526 = vmul.f32 1.0, %v525
    %v527 = vadd.f32 %v517, %v308
    %529 = vrot.lane.b32.xlu0 %v527, 64
    %v530 = vpop.permute.xlu0 %529
    %v532 = vmul.f32 %v526, %v530
    %534 = vrot.lane.b32.xlu0 %v532, 64
    %v535 = vpop.permute.xlu0 %534
    %v537 = vadd.f32 %v447, %v535
    %v538 = vtanh.pop %v537
    %v539 = vsub.f32 %v441, %v538
    %541 = vrot.lane.b32.xlu0 %v539, 96
    %v542 = vpop.permute.xlu0 %541
    %v544 = vmul.f32 %v526, %v542
    %546 = vrot.lane.b32.xlu0 %v544, 32
    %v547 = vpop.permute.xlu0 %546
    %v549 = vadd.f32 %v538, %v547
    %551 = vrot.lane.b32.xlu0 %v549, 64
    %v552 = vpop.permute.xlu0 %551
    %554 = vst.msk [vmem:[#allocation3 + $0x8] sm:$0xf] %vm337, %v552
    %v555 = vld [vmem:[#allocation2 + $0xc] sm:$0xf]
    %v556 = vsel %vm226, %v552, 0
    %558 = vmatprep.subr.mxu0 0.0
    %559 = vmatpush1.msra.mxu0 %v215
    %560 = vmatprep.subr.mxu0 0.0
    %561 = vmatpush1.msra.mxu0 %v216
    %562 = vmatprep.subr.mxu0 0.0
    %563 = vmatpush1.msra.mxu0 %v217
    %564 = vmatprep.subr.mxu0 0.0
    %565 = vmatpush1.msra.mxu0 %v218
    %566 = vmatprep.subr.mxu0 0.0
    %567 = vmatpush1.msra.mxu0 0.0
    %568 = vmatprep.subr.mxu0 0.0
    %569 = vmatpush1.msra.mxu0 0.0
    %570 = vmatprep.subr.mxu0 0.0
    %571 = vmatpush1.msra.mxu0 0.0
    %572 = vmatprep.subr.mxu0 0.0
    %573 = vmatpush1.msra.mxu0 0.0
    %574 = vmatprep.subr.mxu0 0.0
    %575 = vmatpush1.msra.mxu0 0.0
    %576 = vmatprep.subr.mxu0 0.0
    %577 = vmatpush1.msra.mxu0 0.0
    %578 = vmatprep.subr.mxu0 0.0
    %579 = vmatpush1.msra.mxu0 0.0
    %580 = vmatprep.subr.mxu0 0.0
    %581 = vmatpush1.msra.mxu0 0.0
    %582 = vmatprep.subr.mxu0 0.0
    %583 = vmatpush1.msra.mxu0 0.0
    %584 = vmatprep.subr.mxu0 0.0
    %585 = vmatpush1.msra.mxu0 0.0
    %586 = vmatprep.subr.mxu0 0.0
    %587 = vmatpush1.msra.mxu0 0.0
    %588 = vmatprep.subr.mxu0 0.0
    %589 = vmatpush1.msra.mxu0 0.0
    %590 = vmatprep.subr.mxu0 0.0
    %591 = vmatpush1.msra.mxu0 0.0
    %592 = vmatprep.subr.mxu0 0.0
    %593 = vmatpush1.msra.mxu0 0.0
    %594 = vmatprep.subr.mxu0 0.0
    %595 = vmatpush1.msra.mxu0 0.0
    %596 = vmatprep.subr.mxu0 0.0
    %597 = vmatpush1.msra.mxu0 0.0
    %598 = vmatprep.subr.mxu0 0.0
    %599 = vmatpush1.msra.mxu0 0.0
    %600 = vmatprep.subr.mxu0 0.0
    %601 = vmatpush1.msra.mxu0 0.0
    %602 = vmatprep.subr.mxu0 0.0
    %603 = vmatpush1.msra.mxu0 0.0
    %604 = vmatprep.subr.mxu0 0.0
    %605 = vmatpush1.msra.mxu0 0.0
    %606 = vmatprep.subr.mxu0 0.0
    %607 = vmatpush1.msra.mxu0 0.0
    %608 = vmatprep.subr.mxu0 0.0
    %609 = vmatpush1.msra.mxu0 0.0
    %610 = vmatprep.subr.mxu0 0.0
    %611 = vmatpush1.msra.mxu0 0.0
    %612 = vmatprep.subr.mxu0 0.0
    %613 = vmatpush1.msra.mxu0 0.0
    %614 = vmatprep.subr.mxu0 0.0
    %615 = vmatpush1.msra.mxu0 0.0
    %616 = vmatprep.subr.mxu0 0.0
    %617 = vmatpush1.msra.mxu0 0.0
    %618 = vmatprep.subr.mxu0 0.0
    %619 = vmatpush1.msra.mxu0 0.0
    %620 = vmatprep.subr.mxu0 0.0
    %621 = vmatpush1.msra.mxu0 0.0
    %622 = vmatprep.mubr.f32.mxu0 0.0
    %623 = vmatmul.mubr.f32.gmra.mrb[0].mxu0 %v556
    %v624 = vpop.f32.mrb[0].mxu0
    %v625 = vadd.f32 0.0, %v624
    %v626 = vpop.f32.mrb[0].mxu0
    %627 = vdwg.mxu0
    %v628 = vadd.f32 %v555, %v625
    %v629 = vxor.u32 %v628, 2147483648
    %v630 = vmul.f32 %v629, 1.442695
    %v631 = vpow.pop %v630
    %v632 = vadd.f32 %v631, 1.0
    %v633 = vrcp.pop %v632
    %v634 = vmul.f32 1.0, %v633
    %v635 = vadd.f32 %v625, %v308
    %637 = vrot.lane.b32.xlu0 %v635, 64
    %v638 = vpop.permute.xlu0 %637
    %v640 = vmul.f32 %v634, %v638
    %642 = vrot.lane.b32.xlu0 %v640, 64
    %v643 = vpop.permute.xlu0 %642
    %v645 = vadd.f32 %v555, %v643
    %v646 = vtanh.pop %v645
    %v647 = vsub.f32 %v549, %v646
    %649 = vrot.lane.b32.xlu0 %v647, 96
    %v650 = vpop.permute.xlu0 %649
    %v652 = vmul.f32 %v634, %v650
    %654 = vrot.lane.b32.xlu0 %v652, 32
    %v655 = vpop.permute.xlu0 %654
    %v657 = vadd.f32 %v646, %v655
    %659 = vrot.lane.b32.xlu0 %v657, 64
    %v660 = vpop.permute.xlu0 %659
    %662 = vst.msk [vmem:[#allocation3 + $0xc] sm:$0xf] %vm337, %v660
    %v663 = vld [vmem:[#allocation2 + $0x10] sm:$0xf]
    %v664 = vsel %vm226, %v660, 0
    %666 = vmatprep.subr.mxu0 0.0
    %667 = vmatpush1.msra.mxu0 %v215
    %668 = vmatprep.subr.mxu0 0.0
    %669 = vmatpush1.msra.mxu0 %v216
    %670 = vmatprep.subr.mxu0 0.0
    %671 = vmatpush1.msra.mxu0 %v217
    %672 = vmatprep.subr.mxu0 0.0
    %673 = vmatpush1.msra.mxu0 %v218
    %674 = vmatprep.subr.mxu0 0.0
    %675 = vmatpush1.msra.mxu0 0.0
    %676 = vmatprep.subr.mxu0 0.0
    %677 = vmatpush1.msra.mxu0 0.0
    %678 = vmatprep.subr.mxu0 0.0
    %679 = vmatpush1.msra.mxu0 0.0
    %680 = vmatprep.subr.mxu0 0.0
    %681 = vmatpush1.msra.mxu0 0.0
    %682 = vmatprep.subr.mxu0 0.0
    %683 = vmatpush1.msra.mxu0 0.0
    %684 = vmatprep.subr.mxu0 0.0
    %685 = vmatpush1.msra.mxu0 0.0
    %686 = vmatprep.subr.mxu0 0.0
    %687 = vmatpush1.msra.mxu0 0.0
    %688 = vmatprep.subr.mxu0 0.0
    %689 = vmatpush1.msra.mxu0 0.0
    %690 = vmatprep.subr.mxu0 0.0
    %691 = vmatpush1.msra.mxu0 0.0
    %692 = vmatprep.subr.mxu0 0.0
    %693 = vmatpush1.msra.mxu0 0.0
    %694 = vmatprep.subr.mxu0 0.0
    %695 = vmatpush1.msra.mxu0 0.0
    %696 = vmatprep.subr.mxu0 0.0
    %697 = vmatpush1.msra.mxu0 0.0
    %698 = vmatprep.subr.mxu0 0.0
    %699 = vmatpush1.msra.mxu0 0.0
    %700 = vmatprep.subr.mxu0 0.0
    %701 = vmatpush1.msra.mxu0 0.0
    %702 = vmatprep.subr.mxu0 0.0
    %703 = vmatpush1.msra.mxu0 0.0
    %704 = vmatprep.subr.mxu0 0.0
    %705 = vmatpush1.msra.mxu0 0.0
    %706 = vmatprep.subr.mxu0 0.0
    %707 = vmatpush1.msra.mxu0 0.0
    %708 = vmatprep.subr.mxu0 0.0
    %709 = vmatpush1.msra.mxu0 0.0
    %710 = vmatprep.subr.mxu0 0.0
    %711 = vmatpush1.msra.mxu0 0.0
    %712 = vmatprep.subr.mxu0 0.0
    %713 = vmatpush1.msra.mxu0 0.0
    %714 = vmatprep.subr.mxu0 0.0
    %715 = vmatpush1.msra.mxu0 0.0
    %716 = vmatprep.subr.mxu0 0.0
    %717 = vmatpush1.msra.mxu0 0.0
    %718 = vmatprep.subr.mxu0 0.0
    %719 = vmatpush1.msra.mxu0 0.0
    %720 = vmatprep.subr.mxu0 0.0
    %721 = vmatpush1.msra.mxu0 0.0
    %722 = vmatprep.subr.mxu0 0.0
    %723 = vmatpush1.msra.mxu0 0.0
    %724 = vmatprep.subr.mxu0 0.0
    %725 = vmatpush1.msra.mxu0 0.0
    %726 = vmatprep.subr.mxu0 0.0
    %727 = vmatpush1.msra.mxu0 0.0
    %728 = vmatprep.subr.mxu0 0.0
    %729 = vmatpush1.msra.mxu0 0.0
    %730 = vmatprep.mubr.f32.mxu0 0.0
    %731 = vmatmul.mubr.f32.gmra.mrb[0].mxu0 %v664
    %v732 = vpop.f32.mrb[0].mxu0
    %v733 = vadd.f32 0.0, %v732
    %v734 = vpop.f32.mrb[0].mxu0
    %735 = vdwg.mxu0
    %v736 = vadd.f32 %v663, %v733
    %v737 = vxor.u32 %v736, 2147483648
    %v738 = vmul.f32 %v737, 1.442695
    %v739 = vpow.pop %v738
    %v740 = vadd.f32 %v739, 1.0
    %v741 = vrcp.pop %v740
    %v742 = vmul.f32 1.0, %v741
    %v743 = vadd.f32 %v733, %v308
    %745 = vrot.lane.b32.xlu0 %v743, 64
    %v746 = vpop.permute.xlu0 %745
    %v748 = vmul.f32 %v742, %v746
    %750 = vrot.lane.b32.xlu0 %v748, 64
    %v751 = vpop.permute.xlu0 %750
    %v753 = vadd.f32 %v663, %v751
    %v754 = vtanh.pop %v753
    %v755 = vsub.f32 %v657, %v754
    %757 = vrot.lane.b32.xlu0 %v755, 96
    %v758 = vpop.permute.xlu0 %757
    %v760 = vmul.f32 %v742, %v758
    %762 = vrot.lane.b32.xlu0 %v760, 32
    %v763 = vpop.permute.xlu0 %762
    %v765 = vadd.f32 %v754, %v763
    %767 = vrot.lane.b32.xlu0 %v765, 64
    %v768 = vpop.permute.xlu0 %767
    %770 = vst.msk [vmem:[#allocation3 + $0x10] sm:$0xf] %vm337, %v768
    %v771 = vld [vmem:[#allocation2 + $0x14] sm:$0xf]
    %v772 = vsel %vm226, %v768, 0
    %774 = vmatprep.subr.mxu0 0.0
    %775 = vmatpush1.msra.mxu0 %v215
    %776 = vmatprep.subr.mxu0 0.0
    %777 = vmatpush1.msra.mxu0 %v216
    %778 = vmatprep.subr.mxu0 0.0
    %779 = vmatpush1.msra.mxu0 %v217
    %780 = vmatprep.subr.mxu0 0.0
    %781 = vmatpush1.msra.mxu0 %v218
    %782 = vmatprep.subr.mxu0 0.0
    %783 = vmatpush1.msra.mxu0 0.0
    %784 = vmatprep.subr.mxu0 0.0
    %785 = vmatpush1.msra.mxu0 0.0
    %786 = vmatprep.subr.mxu0 0.0
    %787 = vmatpush1.msra.mxu0 0.0
    %788 = vmatprep.subr.mxu0 0.0
    %789 = vmatpush1.msra.mxu0 0.0
    %790 = vmatprep.subr.mxu0 0.0
    %791 = vmatpush1.msra.mxu0 0.0
    %792 = vmatprep.subr.mxu0 0.0
    %793 = vmatpush1.msra.mxu0 0.0
    %794 = vmatprep.subr.mxu0 0.0
    %795 = vmatpush1.msra.mxu0 0.0
    %796 = vmatprep.subr.mxu0 0.0
    %797 = vmatpush1.msra.mxu0 0.0
    %798 = vmatprep.subr.mxu0 0.0
    %799 = vmatpush1.msra.mxu0 0.0
    %800 = vmatprep.subr.mxu0 0.0
    %801 = vmatpush1.msra.mxu0 0.0
    %802 = vmatprep.subr.mxu0 0.0
    %803 = vmatpush1.msra.mxu0 0.0
    %804 = vmatprep.subr.mxu0 0.0
    %805 = vmatpush1.msra.mxu0 0.0
    %806 = vmatprep.subr.mxu0 0.0
    %807 = vmatpush1.msra.mxu0 0.0
    %808 = vmatprep.subr.mxu0 0.0
    %809 = vmatpush1.msra.mxu0 0.0
    %810 = vmatprep.subr.mxu0 0.0
    %811 = vmatpush1.msra.mxu0 0.0
    %812 = vmatprep.subr.mxu0 0.0
    %813 = vmatpush1.msra.mxu0 0.0
    %814 = vmatprep.subr.mxu0 0.0
    %815 = vmatpush1.msra.mxu0 0.0
    %816 = vmatprep.subr.mxu0 0.0
    %817 = vmatpush1.msra.mxu0 0.0
    %818 = vmatprep.subr.mxu0 0.0
    %819 = vmatpush1.msra.mxu0 0.0
    %820 = vmatprep.subr.mxu0 0.0
    %821 = vmatpush1.msra.mxu0 0.0
    %822 = vmatprep.subr.mxu0 0.0
    %823 = vmatpush1.msra.mxu0 0.0
    %824 = vmatprep.subr.mxu0 0.0
    %825 = vmatpush1.msra.mxu0 0.0
    %826 = vmatprep.subr.mxu0 0.0
    %827 = vmatpush1.msra.mxu0 0.0
    %828 = vmatprep.subr.mxu0 0.0
    %829 = vmatpush1.msra.mxu0 0.0
    %830 = vmatprep.subr.mxu0 0.0
    %831 = vmatpush1.msra.mxu0 0.0
    %832 = vmatprep.subr.mxu0 0.0
    %833 = vmatpush1.msra.mxu0 0.0
    %834 = vmatprep.subr.mxu0 0.0
    %835 = vmatpush1.msra.mxu0 0.0
    %836 = vmatprep.subr.mxu0 0.0
    %837 = vmatpush1.msra.mxu0 0.0
    %838 = vmatprep.mubr.f32.mxu0 0.0
    %839 = vmatmul.mubr.f32.gmra.mrb[0].mxu0 %v772
    %v840 = vpop.f32.mrb[0].mxu0
    %v841 = vadd.f32 0.0, %v840
    %v842 = vpop.f32.mrb[0].mxu0
    %843 = vdwg.mxu0
    %v844 = vadd.f32 %v771, %v841
    %v845 = vxor.u32 %v844, 2147483648
    %v846 = vmul.f32 %v845, 1.442695
    %v847 = vpow.pop %v846
    %v848 = vadd.f32 %v847, 1.0
    %v849 = vrcp.pop %v848
    %v850 = vmul.f32 1.0, %v849
    %v851 = vadd.f32 %v841, %v308
    %853 = vrot.lane.b32.xlu0 %v851, 64
    %v854 = vpop.permute.xlu0 %853
    %v856 = vmul.f32 %v850, %v854
    %858 = vrot.lane.b32.xlu0 %v856, 64
    %v859 = vpop.permute.xlu0 %858
    %v861 = vadd.f32 %v771, %v859
    %v862 = vtanh.pop %v861
    %v863 = vsub.f32 %v765, %v862
    %865 = vrot.lane.b32.xlu0 %v863, 96
    %v866 = vpop.permute.xlu0 %865
    %v868 = vmul.f32 %v850, %v866
    %870 = vrot.lane.b32.xlu0 %v868, 32
    %v871 = vpop.permute.xlu0 %870
    %v873 = vadd.f32 %v862, %v871
    %875 = vrot.lane.b32.xlu0 %v873, 64
    %v876 = vpop.permute.xlu0 %875
    %878 = vst.msk [vmem:[#allocation3 + $0x14] sm:$0xf] %vm337, %v876
    %v879 = vld [vmem:[#allocation2 + $0x18] sm:$0xf]
    %v880 = vsel %vm226, %v876, 0
    %882 = vmatprep.subr.mxu0 0.0
    %883 = vmatpush1.msra.mxu0 %v215
    %884 = vmatprep.subr.mxu0 0.0
    %885 = vmatpush1.msra.mxu0 %v216
    %886 = vmatprep.subr.mxu0 0.0
    %887 = vmatpush1.msra.mxu0 %v217
    %888 = vmatprep.subr.mxu0 0.0
    %889 = vmatpush1.msra.mxu0 %v218
    %890 = vmatprep.subr.mxu0 0.0
    %891 = vmatpush1.msra.mxu0 0.0
    %892 = vmatprep.subr.mxu0 0.0
    %893 = vmatpush1.msra.mxu0 0.0
    %894 = vmatprep.subr.mxu0 0.0
    %895 = vmatpush1.msra.mxu0 0.0
    %896 = vmatprep.subr.mxu0 0.0
    %897 = vmatpush1.msra.mxu0 0.0
    %898 = vmatprep.subr.mxu0 0.0
    %899 = vmatpush1.msra.mxu0 0.0
    %900 = vmatprep.subr.mxu0 0.0
    %901 = vmatpush1.msra.mxu0 0.0
    %902 = vmatprep.subr.mxu0 0.0
    %903 = vmatpush1.msra.mxu0 0.0
    %904 = vmatprep.subr.mxu0 0.0
    %905 = vmatpush1.msra.mxu0 0.0
    %906 = vmatprep.subr.mxu0 0.0
    %907 = vmatpush1.msra.mxu0 0.0
    %908 = vmatprep.subr.mxu0 0.0
    %909 = vmatpush1.msra.mxu0 0.0
    %910 = vmatprep.subr.mxu0 0.0
    %911 = vmatpush1.msra.mxu0 0.0
    %912 = vmatprep.subr.mxu0 0.0
    %913 = vmatpush1.msra.mxu0 0.0
    %914 = vmatprep.subr.mxu0 0.0
    %915 = vmatpush1.msra.mxu0 0.0
    %916 = vmatprep.subr.mxu0 0.0
    %917 = vmatpush1.msra.mxu0 0.0
    %918 = vmatprep.subr.mxu0 0.0
    %919 = vmatpush1.msra.mxu0 0.0
    %920 = vmatprep.subr.mxu0 0.0
    %921 = vmatpush1.msra.mxu0 0.0
    %922 = vmatprep.subr.mxu0 0.0
    %923 = vmatpush1.msra.mxu0 0.0
    %924 = vmatprep.subr.mxu0 0.0
    %925 = vmatpush1.msra.mxu0 0.0
    %926 = vmatprep.subr.mxu0 0.0
    %927 = vmatpush1.msra.mxu0 0.0
    %928 = vmatprep.subr.mxu0 0.0
    %929 = vmatpush1.msra.mxu0 0.0
    %930 = vmatprep.subr.mxu0 0.0
    %931 = vmatpush1.msra.mxu0 0.0
    %932 = vmatprep.subr.mxu0 0.0
    %933 = vmatpush1.msra.mxu0 0.0
    %934 = vmatprep.subr.mxu0 0.0
    %935 = vmatpush1.msra.mxu0 0.0
    %936 = vmatprep.subr.mxu0 0.0
    %937 = vmatpush1.msra.mxu0 0.0
    %938 = vmatprep.subr.mxu0 0.0
    %939 = vmatpush1.msra.mxu0 0.0
    %940 = vmatprep.subr.mxu0 0.0
    %941 = vmatpush1.msra.mxu0 0.0
    %942 = vmatprep.subr.mxu0 0.0
    %943 = vmatpush1.msra.mxu0 0.0
    %944 = vmatprep.subr.mxu0 0.0
    %945 = vmatpush1.msra.mxu0 0.0
    %946 = vmatprep.mubr.f32.mxu0 0.0
    %947 = vmatmul.mubr.f32.gmra.mrb[0].mxu0 %v880
    %v948 = vpop.f32.mrb[0].mxu0
    %v949 = vadd.f32 0.0, %v948
    %v950 = vpop.f32.mrb[0].mxu0
    %951 = vdwg.mxu0
    %v952 = vadd.f32 %v879, %v949
    %v953 = vxor.u32 %v952, 2147483648
    %v954 = vmul.f32 %v953, 1.442695
    %v955 = vpow.pop %v954
    %v956 = vadd.f32 %v955, 1.0
    %v957 = vrcp.pop %v956
    %v958 = vmul.f32 1.0, %v957
    %v959 = vadd.f32 %v949, %v308
    %961 = vrot.lane.b32.xlu0 %v959, 64
    %v962 = vpop.permute.xlu0 %961
    %v964 = vmul.f32 %v958, %v962
    %966 = vrot.lane.b32.xlu0 %v964, 64
    %v967 = vpop.permute.xlu0 %966
    %v969 = vadd.f32 %v879, %v967
    %v970 = vtanh.pop %v969
    %v971 = vsub.f32 %v873, %v970
    %973 = vrot.lane.b32.xlu0 %v971, 96
    %v974 = vpop.permute.xlu0 %973
    %v976 = vmul.f32 %v958, %v974
    %978 = vrot.lane.b32.xlu0 %v976, 32
    %v979 = vpop.permute.xlu0 %978
    %v981 = vadd.f32 %v970, %v979
    %983 = vrot.lane.b32.xlu0 %v981, 64
    %v984 = vpop.permute.xlu0 %983
    %986 = vst.msk [vmem:[#allocation3 + $0x18] sm:$0xf] %vm337, %v984
    %v987 = vld [vmem:[#allocation2 + $0x1c] sm:$0xf]
    %v988 = vsel %vm226, %v984, 0
    %990 = vmatprep.subr.mxu0 0.0
    %991 = vmatpush1.msra.mxu0 %v215
    %992 = vmatprep.subr.mxu0 0.0
    %993 = vmatpush1.msra.mxu0 %v216
    %994 = vmatprep.subr.mxu0 0.0
    %995 = vmatpush1.msra.mxu0 %v217
    %996 = vmatprep.subr.mxu0 0.0
    %997 = vmatpush1.msra.mxu0 %v218
    %998 = vmatprep.subr.mxu0 0.0
    %999 = vmatpush1.msra.mxu0 0.0
    %1000 = vmatprep.subr.mxu0 0.0
    %1001 = vmatpush1.msra.mxu0 0.0
    %1002 = vmatprep.subr.mxu0 0.0
    %1003 = vmatpush1.msra.mxu0 0.0
    %1004 = vmatprep.subr.mxu0 0.0
    %1005 = vmatpush1.msra.mxu0 0.0
    %1006 = vmatprep.subr.mxu0 0.0
    %1007 = vmatpush1.msra.mxu0 0.0
    %1008 = vmatprep.subr.mxu0 0.0
    %1009 = vmatpush1.msra.mxu0 0.0
    %1010 = vmatprep.subr.mxu0 0.0
    %1011 = vmatpush1.msra.mxu0 0.0
    %1012 = vmatprep.subr.mxu0 0.0
    %1013 = vmatpush1.msra.mxu0 0.0
    %1014 = vmatprep.subr.mxu0 0.0
    %1015 = vmatpush1.msra.mxu0 0.0
    %1016 = vmatprep.subr.mxu0 0.0
    %1017 = vmatpush1.msra.mxu0 0.0
    %1018 = vmatprep.subr.mxu0 0.0
    %1019 = vmatpush1.msra.mxu0 0.0
    %1020 = vmatprep.subr.mxu0 0.0
    %1021 = vmatpush1.msra.mxu0 0.0
    %1022 = vmatprep.subr.mxu0 0.0
    %1023 = vmatpush1.msra.mxu0 0.0
    %1024 = vmatprep.subr.mxu0 0.0
    %1025 = vmatpush1.msra.mxu0 0.0
    %1026 = vmatprep.subr.mxu0 0.0
    %1027 = vmatpush1.msra.mxu0 0.0
    %1028 = vmatprep.subr.mxu0 0.0
    %1029 = vmatpush1.msra.mxu0 0.0
    %1030 = vmatprep.subr.mxu0 0.0
    %1031 = vmatpush1.msra.mxu0 0.0
    %1032 = vmatprep.subr.mxu0 0.0
    %1033 = vmatpush1.msra.mxu0 0.0
    %1034 = vmatprep.subr.mxu0 0.0
    %1035 = vmatpush1.msra.mxu0 0.0
    %1036 = vmatprep.subr.mxu0 0.0
    %1037 = vmatpush1.msra.mxu0 0.0
    %1038 = vmatprep.subr.mxu0 0.0
    %1039 = vmatpush1.msra.mxu0 0.0
    %1040 = vmatprep.subr.mxu0 0.0
    %1041 = vmatpush1.msra.mxu0 0.0
    %1042 = vmatprep.subr.mxu0 0.0
    %1043 = vmatpush1.msra.mxu0 0.0
    %1044 = vmatprep.subr.mxu0 0.0
    %1045 = vmatpush1.msra.mxu0 0.0
    %1046 = vmatprep.subr.mxu0 0.0
    %1047 = vmatpush1.msra.mxu0 0.0
    %1048 = vmatprep.subr.mxu0 0.0
    %1049 = vmatpush1.msra.mxu0 0.0
    %1050 = vmatprep.subr.mxu0 0.0
    %1051 = vmatpush1.msra.mxu0 0.0
    %1052 = vmatprep.subr.mxu0 0.0
    %1053 = vmatpush1.msra.mxu0 0.0
    %1054 = vmatprep.mubr.f32.mxu0 0.0
    %1055 = vmatmul.mubr.f32.gmra.mrb[0].mxu0 %v988
    %v1056 = vpop.f32.mrb[0].mxu0
    %v1057 = vadd.f32 0.0, %v1056
    %v1058 = vpop.f32.mrb[0].mxu0
    %1059 = vdwg.mxu0
    %v1060 = vadd.f32 %v987, %v1057
    %v1061 = vxor.u32 %v1060, 2147483648
    %v1062 = vmul.f32 %v1061, 1.442695
    %v1063 = vpow.pop %v1062
    %v1064 = vadd.f32 %v1063, 1.0
    %v1065 = vrcp.pop %v1064
    %v1066 = vmul.f32 1.0, %v1065
    %v1067 = vadd.f32 %v1057, %v308
    %1069 = vrot.lane.b32.xlu0 %v1067, 64
    %v1070 = vpop.permute.xlu0 %1069
    %v1072 = vmul.f32 %v1066, %v1070
    %1074 = vrot.lane.b32.xlu0 %v1072, 64
    %v1075 = vpop.permute.xlu0 %1074
    %v1077 = vadd.f32 %v987, %v1075
    %v1078 = vtanh.pop %v1077
    %v1079 = vsub.f32 %v981, %v1078
    %1081 = vrot.lane.b32.xlu0 %v1079, 96
    %v1082 = vpop.permute.xlu0 %1081
    %v1084 = vmul.f32 %v1066, %v1082
    %1086 = vrot.lane.b32.xlu0 %v1084, 32
    %v1087 = vpop.permute.xlu0 %1086
    %v1089 = vadd.f32 %v1078, %v1087
    %1091 = vrot.lane.b32.xlu0 %v1089, 64
    %v1092 = vpop.permute.xlu0 %1091
    %1094 = vst.msk [vmem:[#allocation3 + $0x1c] sm:$0xf] %vm337, %v1092
    %v1095 = vld [vmem:[#allocation3] sm:$0xff]
    %v1096 = vld [vmem:[#allocation3 + $0x8] sm:$0xff]
    %v1097 = vld [vmem:[#allocation3 + $0x10] sm:$0xff]
    %v1098 = vld [vmem:[#allocation3 + $0x18] sm:$0xff]
    %v1099 = vld [vmem:[%s5] sm:$0xff]
    %v1100 = vld [vmem:[%s5 + $0x8] sm:$0xff]
    %v1101 = vld [vmem:[%s5 + $0x10] sm:$0xff]
    %v1102 = vld [vmem:[%s5 + $0x18] sm:$0xff]
    %v1103 = vld [vmem:[#allocation9] sm:$0x1]
    %v1105 = vlaneseq
    %v1106 = vshrl.u32 %v1105, 7
    %v1107 = vsub.s32 0, %v1106
    %v1108 = vrot.slane %v1103, %v1107
    %v1111 = vsel %vm226, %v1095, 0
    %v1114 = vsel %vm226, %v1096, 0
    %v1117 = vsel %vm226, %v1097, 0
    %v1120 = vsel %vm226, %v1098, 0
    %1122 = vmatprep.subr.mxu0 0.0
    %1123 = vmatpush1.msra.mxu0 %v1099
    %1124 = vmatprep.subr.mxu0 0.0
    %1125 = vmatpush1.msra.mxu0 %v1100
    %1126 = vmatprep.subr.mxu0 0.0
    %1127 = vmatpush1.msra.mxu0 %v1101
    %1128 = vmatprep.subr.mxu0 0.0
    %1129 = vmatpush1.msra.mxu0 %v1102
    %1130 = vmatprep.subr.mxu0 0.0
    %1131 = vmatpush1.msra.mxu0 0.0
    %1132 = vmatprep.subr.mxu0 0.0
    %1133 = vmatpush1.msra.mxu0 0.0
    %1134 = vmatprep.subr.mxu0 0.0
    %1135 = vmatpush1.msra.mxu0 0.0
    %1136 = vmatprep.subr.mxu0 0.0
    %1137 = vmatpush1.msra.mxu0 0.0
    %1138 = vmatprep.subr.mxu0 0.0
    %1139 = vmatpush1.msra.mxu0 0.0
    %1140 = vmatprep.subr.mxu0 0.0
    %1141 = vmatpush1.msra.mxu0 0.0
    %1142 = vmatprep.subr.mxu0 0.0
    %1143 = vmatpush1.msra.mxu0 0.0
    %1144 = vmatprep.subr.mxu0 0.0
    %1145 = vmatpush1.msra.mxu0 0.0
    %1146 = vmatprep.subr.mxu0 0.0
    %1147 = vmatpush1.msra.mxu0 0.0
    %1148 = vmatprep.subr.mxu0 0.0
    %1149 = vmatpush1.msra.mxu0 0.0
    %1150 = vmatprep.subr.mxu0 0.0
    %1151 = vmatpush1.msra.mxu0 0.0
    %1152 = vmatprep.subr.mxu0 0.0
    %1153 = vmatpush1.msra.mxu0 0.0
    %1154 = vmatprep.subr.mxu0 0.0
    %1155 = vmatpush1.msra.mxu0 0.0
    %1156 = vmatprep.subr.mxu0 0.0
    %1157 = vmatpush1.msra.mxu0 0.0
    %1158 = vmatprep.subr.mxu0 0.0
    %1159 = vmatpush1.msra.mxu0 0.0
    %1160 = vmatprep.subr.mxu0 0.0
    %1161 = vmatpush1.msra.mxu0 0.0
    %1162 = vmatprep.subr.mxu0 0.0
    %1163 = vmatpush1.msra.mxu0 0.0
    %1164 = vmatprep.subr.mxu0 0.0
    %1165 = vmatpush1.msra.mxu0 0.0
    %1166 = vmatprep.subr.mxu0 0.0
    %1167 = vmatpush1.msra.mxu0 0.0
    %1168 = vmatprep.subr.mxu0 0.0
    %1169 = vmatpush1.msra.mxu0 0.0
    %1170 = vmatprep.subr.mxu0 0.0
    %1171 = vmatpush1.msra.mxu0 0.0
    %1172 = vmatprep.subr.mxu0 0.0
    %1173 = vmatpush1.msra.mxu0 0.0
    %1174 = vmatprep.subr.mxu0 0.0
    %1175 = vmatpush1.msra.mxu0 0.0
    %1176 = vmatprep.subr.mxu0 0.0
    %1177 = vmatpush1.msra.mxu0 0.0
    %1178 = vmatprep.subr.mxu0 0.0
    %1179 = vmatpush1.msra.mxu0 0.0
    %1180 = vmatprep.subr.mxu0 0.0
    %1181 = vmatpush1.msra.mxu0 0.0
    %1182 = vmatprep.subr.mxu0 0.0
    %1183 = vmatpush1.msra.mxu0 0.0
    %1184 = vmatprep.subr.mxu0 0.0
    %1185 = vmatpush1.msra.mxu0 0.0
    %1186 = vmatprep.mubr.f32.mxu0 0.0
    %1187 = vmatmul.mubr.f32.gmra.mrb[0].mxu0 %v1111
    %v1188 = vpop.f32.mrb[0].mxu0
    %v1189 = vadd.f32 %v1108, %v1188
    %v1190 = vpop.f32.mrb[0].mxu0
    %1191 = vmatprep.mubr.f32.mxu0 0.0
    %1192 = vmatmul.mubr.f32.gmra.mrb[0].mxu0 %v1114
    %v1193 = vpop.f32.mrb[0].mxu0
    %v1194 = vadd.f32 %v1108, %v1193
    %v1195 = vpop.f32.mrb[0].mxu0
    %1196 = vmatprep.mubr.f32.mxu0 0.0
    %1197 = vmatmul.mubr.f32.gmra.mrb[0].mxu0 %v1117
    %v1198 = vpop.f32.mrb[0].mxu0
    %v1199 = vadd.f32 %v1108, %v1198
    %v1200 = vpop.f32.mrb[0].mxu0
    %1201 = vmatprep.mubr.f32.mxu0 0.0
    %1202 = vmatmul.mubr.f32.gmra.mrb[0].mxu0 %v1120
    %v1203 = vpop.f32.mrb[0].mxu0
    %v1204 = vadd.f32 %v1108, %v1203
    %v1205 = vpop.f32.mrb[0].mxu0
    %1206 = vdwg.mxu0
    %1207 = vst.msk [vmem:[#allocation2] sm:$0xff] %vm210, %v1189
    %1208 = vst.msk [vmem:[#allocation2 + $0x8] sm:$0xff] %vm210, %v1194
    %1209 = vst.msk [vmem:[#allocation2 + $0x10] sm:$0xff] %vm210, %v1199
    %1210 = vst.msk [vmem:[#allocation2 + $0x18] sm:$0xff] %vm210, %v1204
    %v1211 = vld [vmem:[%s6] sm:$0xff]
    %v1212 = vld [vmem:[%s6 + $0x8] sm:$0xff]
    %v1213 = vld [vmem:[%s6 + $0x10] sm:$0xff]
    %v1214 = vld [vmem:[%s6 + $0x18] sm:$0xff]
    %v1215 = vld [vmem:[%s8] sm:$0x1]
    %v1217 = vlaneseq
    %v1218 = vshrl.u32 %v1217, 7
    %v1219 = vsub.s32 0, %v1218
    %v1220 = vrot.slane %v1215, %v1219
    %v1221 = vld [vmem:[#allocation2] sm:$0xf]
    %1222 = vmatprep.subr.mxu0 0.0
    %1223 = vmatpush1.msra.mxu0 %v1211
    %1224 = vmatprep.subr.mxu0 0.0
    %1225 = vmatpush1.msra.mxu0 %v1212
    %1226 = vmatprep.subr.mxu0 0.0
    %1227 = vmatpush1.msra.mxu0 %v1213
    %1228 = vmatprep.subr.mxu0 0.0
    %1229 = vmatpush1.msra.mxu0 %v1214
    %1230 = vmatprep.subr.mxu0 0.0
    %1231 = vmatpush1.msra.mxu0 0.0
    %1232 = vmatprep.subr.mxu0 0.0
    %1233 = vmatpush1.msra.mxu0 0.0
    %1234 = vmatprep.subr.mxu0 0.0
    %1235 = vmatpush1.msra.mxu0 0.0
    %1236 = vmatprep.subr.mxu0 0.0
    %1237 = vmatpush1.msra.mxu0 0.0
    %1238 = vmatprep.subr.mxu0 0.0
    %1239 = vmatpush1.msra.mxu0 0.0
    %1240 = vmatprep.subr.mxu0 0.0
    %1241 = vmatpush1.msra.mxu0 0.0
    %1242 = vmatprep.subr.mxu0 0.0
    %1243 = vmatpush1.msra.mxu0 0.0
    %1244 = vmatprep.subr.mxu0 0.0
    %1245 = vmatpush1.msra.mxu0 0.0
    %1246 = vmatprep.subr.mxu0 0.0
    %1247 = vmatpush1.msra.mxu0 0.0
    %1248 = vmatprep.subr.mxu0 0.0
    %1249 = vmatpush1.msra.mxu0 0.0
    %1250 = vmatprep.subr.mxu0 0.0
    %1251 = vmatpush1.msra.mxu0 0.0
    %1252 = vmatprep.subr.mxu0 0.0
    %1253 = vmatpush1.msra.mxu0 0.0
    %1254 = vmatprep.subr.mxu0 0.0
    %1255 = vmatpush1.msra.mxu0 0.0
    %1256 = vmatprep.subr.mxu0 0.0
    %1257 = vmatpush1.msra.mxu0 0.0
    %1258 = vmatprep.subr.mxu0 0.0
    %1259 = vmatpush1.msra.mxu0 0.0
    %1260 = vmatprep.subr.mxu0 0.0
    %1261 = vmatpush1.msra.mxu0 0.0
    %1262 = vmatprep.subr.mxu0 0.0
    %1263 = vmatpush1.msra.mxu0 0.0
    %1264 = vmatprep.subr.mxu0 0.0
    %1265 = vmatpush1.msra.mxu0 0.0
    %1266 = vmatprep.subr.mxu0 0.0
    %1267 = vmatpush1.msra.mxu0 0.0
    %1268 = vmatprep.subr.mxu0 0.0
    %1269 = vmatpush1.msra.mxu0 0.0
    %1270 = vmatprep.subr.mxu0 0.0
    %1271 = vmatpush1.msra.mxu0 0.0
    %1272 = vmatprep.subr.mxu0 0.0
    %1273 = vmatpush1.msra.mxu0 0.0
    %1274 = vmatprep.subr.mxu0 0.0
    %1275 = vmatpush1.msra.mxu0 0.0
    %1276 = vmatprep.subr.mxu0 0.0
    %1277 = vmatpush1.msra.mxu0 0.0
    %1278 = vmatprep.subr.mxu0 0.0
    %1279 = vmatpush1.msra.mxu0 0.0
    %1280 = vmatprep.subr.mxu0 0.0
    %1281 = vmatpush1.msra.mxu0 0.0
    %1282 = vmatprep.subr.mxu0 0.0
    %1283 = vmatpush1.msra.mxu0 0.0
    %1284 = vmatprep.subr.mxu0 0.0
    %1285 = vmatpush1.msra.mxu0 0.0
    %1286 = vmatprep.mubr.f32.mxu0 0.0
    %1287 = vmatmul.mubr.f32.gmra.mrb[0].mxu0 %v228
    %v1288 = vpop.f32.mrb[0].mxu0
    %v1289 = vadd.f32 0.0, %v1288
    %v1290 = vpop.f32.mrb[0].mxu0
    %1291 = vdwg.mxu0
    %v1292 = vadd.f32 %v1221, %v1289
    %v1293 = vxor.u32 %v1292, 2147483648
    %v1294 = vmul.f32 %v1293, 1.442695
    %v1295 = vpow.pop %v1294
    %v1296 = vadd.f32 %v1295, 1.0
    %v1297 = vrcp.pop %v1296
    %v1298 = vmul.f32 1.0, %v1297
    %1299 = vrot.lane.b32.xlu0 %v1220, 64
    %v1300 = vpop.permute.xlu0 %1299
    %v1302 = vadd.f32 %v1289, %v1300
    %1304 = vrot.lane.b32.xlu0 %v1302, 64
    %v1305 = vpop.permute.xlu0 %1304
    %v1307 = vmul.f32 %v1298, %v1305
    %1309 = vrot.lane.b32.xlu0 %v1307, 64
    %v1310 = vpop.permute.xlu0 %1309
    %v1312 = vadd.f32 %v1221, %v1310
    %v1313 = vtanh.pop %v1312
    %v1314 = vsub.f32 0.0, %v1313
    %1316 = vrot.lane.b32.xlu0 %v1314, 96
    %v1317 = vpop.permute.xlu0 %1316
    %v1319 = vmul.f32 %v1298, %v1317
    %1321 = vrot.lane.b32.xlu0 %v1319, 32
    %v1322 = vpop.permute.xlu0 %1321
    %v1324 = vadd.f32 %v1313, %v1322
    %v1325 = vld [vmem:[#allocation2 + $0x4] sm:$0xf]
    %1327 = vrot.lane.b32.xlu0 %v1324, 64
    %v1328 = vpop.permute.xlu0 %1327
    %v1329 = vsel %vm226, %v1328, 0
    %1331 = vmatprep.subr.mxu0 0.0
    %1332 = vmatpush1.msra.mxu0 %v1211
    %1333 = vmatprep.subr.mxu0 0.0
    %1334 = vmatpush1.msra.mxu0 %v1212
    %1335 = vmatprep.subr.mxu0 0.0
    %1336 = vmatpush1.msra.mxu0 %v1213
    %1337 = vmatprep.subr.mxu0 0.0
    %1338 = vmatpush1.msra.mxu0 %v1214
    %1339 = vmatprep.subr.mxu0 0.0
    %1340 = vmatpush1.msra.mxu0 0.0
    %1341 = vmatprep.subr.mxu0 0.0
    %1342 = vmatpush1.msra.mxu0 0.0
    %1343 = vmatprep.subr.mxu0 0.0
    %1344 = vmatpush1.msra.mxu0 0.0
    %1345 = vmatprep.subr.mxu0 0.0
    %1346 = vmatpush1.msra.mxu0 0.0
    %1347 = vmatprep.subr.mxu0 0.0
    %1348 = vmatpush1.msra.mxu0 0.0
    %1349 = vmatprep.subr.mxu0 0.0
    %1350 = vmatpush1.msra.mxu0 0.0
    %1351 = vmatprep.subr.mxu0 0.0
    %1352 = vmatpush1.msra.mxu0 0.0
    %1353 = vmatprep.subr.mxu0 0.0
    %1354 = vmatpush1.msra.mxu0 0.0
    %1355 = vmatprep.subr.mxu0 0.0
    %1356 = vmatpush1.msra.mxu0 0.0
    %1357 = vmatprep.subr.mxu0 0.0
    %1358 = vmatpush1.msra.mxu0 0.0
    %1359 = vmatprep.subr.mxu0 0.0
    %1360 = vmatpush1.msra.mxu0 0.0
    %1361 = vmatprep.subr.mxu0 0.0
    %1362 = vmatpush1.msra.mxu0 0.0
    %1363 = vmatprep.subr.mxu0 0.0
    %1364 = vmatpush1.msra.mxu0 0.0
    %1365 = vmatprep.subr.mxu0 0.0
    %1366 = vmatpush1.msra.mxu0 0.0
    %1367 = vmatprep.subr.mxu0 0.0
    %1368 = vmatpush1.msra.mxu0 0.0
    %1369 = vmatprep.subr.mxu0 0.0
    %1370 = vmatpush1.msra.mxu0 0.0
    %1371 = vmatprep.subr.mxu0 0.0
    %1372 = vmatpush1.msra.mxu0 0.0
    %1373 = vmatprep.subr.mxu0 0.0
    %1374 = vmatpush1.msra.mxu0 0.0
    %1375 = vmatprep.subr.mxu0 0.0
    %1376 = vmatpush1.msra.mxu0 0.0
    %1377 = vmatprep.subr.mxu0 0.0
    %1378 = vmatpush1.msra.mxu0 0.0
    %1379 = vmatprep.subr.mxu0 0.0
    %1380 = vmatpush1.msra.mxu0 0.0
    %1381 = vmatprep.subr.mxu0 0.0
    %1382 = vmatpush1.msra.mxu0 0.0
    %1383 = vmatprep.subr.mxu0 0.0
    %1384 = vmatpush1.msra.mxu0 0.0
    %1385 = vmatprep.subr.mxu0 0.0
    %1386 = vmatpush1.msra.mxu0 0.0
    %1387 = vmatprep.subr.mxu0 0.0
    %1388 = vmatpush1.msra.mxu0 0.0
    %1389 = vmatprep.subr.mxu0 0.0
    %1390 = vmatpush1.msra.mxu0 0.0
    %1391 = vmatprep.subr.mxu0 0.0
    %1392 = vmatpush1.msra.mxu0 0.0
    %1393 = vmatprep.subr.mxu0 0.0
    %1394 = vmatpush1.msra.mxu0 0.0
    %1395 = vmatprep.mubr.f32.mxu0 0.0
    %1396 = vmatmul.mubr.f32.gmra.mrb[0].mxu0 %v1329
    %v1397 = vpop.f32.mrb[0].mxu0
    %v1398 = vadd.f32 0.0, %v1397
    %v1399 = vpop.f32.mrb[0].mxu0
    %1400 = vdwg.mxu0
    %v1401 = vadd.f32 %v1325, %v1398
    %v1402 = vxor.u32 %v1401, 2147483648
    %v1403 = vmul.f32 %v1402, 1.442695
    %v1404 = vpow.pop %v1403
    %v1405 = vadd.f32 %v1404, 1.0
    %v1406 = vrcp.pop %v1405
    %v1407 = vmul.f32 1.0, %v1406
    %v1408 = vadd.f32 %v1398, %v1300
    %1410 = vrot.lane.b32.xlu0 %v1408, 64
    %v1411 = vpop.permute.xlu0 %1410
    %v1413 = vmul.f32 %v1407, %v1411
    %1415 = vrot.lane.b32.xlu0 %v1413, 64
    %v1416 = vpop.permute.xlu0 %1415
    %v1418 = vadd.f32 %v1325, %v1416
    %v1419 = vtanh.pop %v1418
    %v1420 = vsub.f32 %v1324, %v1419
    %1422 = vrot.lane.b32.xlu0 %v1420, 96
    %v1423 = vpop.permute.xlu0 %1422
    %v1425 = vmul.f32 %v1407, %v1423
    %1427 = vrot.lane.b32.xlu0 %v1425, 32
    %v1428 = vpop.permute.xlu0 %1427
    %v1430 = vadd.f32 %v1419, %v1428
    %v1431 = vld [vmem:[#allocation2 + $0x8] sm:$0xf]
    %1433 = vrot.lane.b32.xlu0 %v1430, 64
    %v1434 = vpop.permute.xlu0 %1433
    %v1435 = vsel %vm226, %v1434, 0
    %1437 = vmatprep.subr.mxu0 0.0
    %1438 = vmatpush1.msra.mxu0 %v1211
    %1439 = vmatprep.subr.mxu0 0.0
    %1440 = vmatpush1.msra.mxu0 %v1212
    %1441 = vmatprep.subr.mxu0 0.0
    %1442 = vmatpush1.msra.mxu0 %v1213
    %1443 = vmatprep.subr.mxu0 0.0
    %1444 = vmatpush1.msra.mxu0 %v1214
    %1445 = vmatprep.subr.mxu0 0.0
    %1446 = vmatpush1.msra.mxu0 0.0
    %1447 = vmatprep.subr.mxu0 0.0
    %1448 = vmatpush1.msra.mxu0 0.0
    %1449 = vmatprep.subr.mxu0 0.0
    %1450 = vmatpush1.msra.mxu0 0.0
    %1451 = vmatprep.subr.mxu0 0.0
    %1452 = vmatpush1.msra.mxu0 0.0
    %1453 = vmatprep.subr.mxu0 0.0
    %1454 = vmatpush1.msra.mxu0 0.0
    %1455 = vmatprep.subr.mxu0 0.0
    %1456 = vmatpush1.msra.mxu0 0.0
    %1457 = vmatprep.subr.mxu0 0.0
    %1458 = vmatpush1.msra.mxu0 0.0
    %1459 = vmatprep.subr.mxu0 0.0
    %1460 = vmatpush1.msra.mxu0 0.0
    %1461 = vmatprep.subr.mxu0 0.0
    %1462 = vmatpush1.msra.mxu0 0.0
    %1463 = vmatprep.subr.mxu0 0.0
    %1464 = vmatpush1.msra.mxu0 0.0
    %1465 = vmatprep.subr.mxu0 0.0
    %1466 = vmatpush1.msra.mxu0 0.0
    %1467 = vmatprep.subr.mxu0 0.0
    %1468 = vmatpush1.msra.mxu0 0.0
    %1469 = vmatprep.subr.mxu0 0.0
    %1470 = vmatpush1.msra.mxu0 0.0
    %1471 = vmatprep.subr.mxu0 0.0
    %1472 = vmatpush1.msra.mxu0 0.0
    %1473 = vmatprep.subr.mxu0 0.0
    %1474 = vmatpush1.msra.mxu0 0.0
    %1475 = vmatprep.subr.mxu0 0.0
    %1476 = vmatpush1.msra.mxu0 0.0
    %1477 = vmatprep.subr.mxu0 0.0
    %1478 = vmatpush1.msra.mxu0 0.0
    %1479 = vmatprep.subr.mxu0 0.0
    %1480 = vmatpush1.msra.mxu0 0.0
    %1481 = vmatprep.subr.mxu0 0.0
    %1482 = vmatpush1.msra.mxu0 0.0
    %1483 = vmatprep.subr.mxu0 0.0
    %1484 = vmatpush1.msra.mxu0 0.0
    %1485 = vmatprep.subr.mxu0 0.0
    %1486 = vmatpush1.msra.mxu0 0.0
    %1487 = vmatprep.subr.mxu0 0.0
    %1488 = vmatpush1.msra.mxu0 0.0
    %1489 = vmatprep.subr.mxu0 0.0
    %1490 = vmatpush1.msra.mxu0 0.0
    %1491 = vmatprep.subr.mxu0 0.0
    %1492 = vmatpush1.msra.mxu0 0.0
    %1493 = vmatprep.subr.mxu0 0.0
    %1494 = vmatpush1.msra.mxu0 0.0
    %1495 = vmatprep.subr.mxu0 0.0
    %1496 = vmatpush1.msra.mxu0 0.0
    %1497 = vmatprep.subr.mxu0 0.0
    %1498 = vmatpush1.msra.mxu0 0.0
    %1499 = vmatprep.subr.mxu0 0.0
    %1500 = vmatpush1.msra.mxu0 0.0
    %1501 = vmatprep.mubr.f32.mxu0 0.0
    %1502 = vmatmul.mubr.f32.gmra.mrb[0].mxu0 %v1435
    %v1503 = vpop.f32.mrb[0].mxu0
    %v1504 = vadd.f32 0.0, %v1503
    %v1505 = vpop.f32.mrb[0].mxu0
    %1506 = vdwg.mxu0
    %v1507 = vadd.f32 %v1431, %v1504
    %v1508 = vxor.u32 %v1507, 2147483648
    %v1509 = vmul.f32 %v1508, 1.442695
    %v1510 = vpow.pop %v1509
    %v1511 = vadd.f32 %v1510, 1.0
    %v1512 = vrcp.pop %v1511
    %v1513 = vmul.f32 1.0, %v1512
    %v1514 = vadd.f32 %v1504, %v1300
    %1516 = vrot.lane.b32.xlu0 %v1514, 64
    %v1517 = vpop.permute.xlu0 %1516
    %v1519 = vmul.f32 %v1513, %v1517
    %1521 = vrot.lane.b32.xlu0 %v1519, 64
    %v1522 = vpop.permute.xlu0 %1521
    %v1524 = vadd.f32 %v1431, %v1522
    %v1525 = vtanh.pop %v1524
    %v1526 = vsub.f32 %v1430, %v1525
    %1528 = vrot.lane.b32.xlu0 %v1526, 96
    %v1529 = vpop.permute.xlu0 %1528
    %v1531 = vmul.f32 %v1513, %v1529
    %1533 = vrot.lane.b32.xlu0 %v1531, 32
    %v1534 = vpop.permute.xlu0 %1533
    %v1536 = vadd.f32 %v1525, %v1534
    %v1537 = vld [vmem:[#allocation2 + $0xc] sm:$0xf]
    %1539 = vrot.lane.b32.xlu0 %v1536, 64
    %v1540 = vpop.permute.xlu0 %1539
    %v1541 = vsel %vm226, %v1540, 0
    %1543 = vmatprep.subr.mxu0 0.0
    %1544 = vmatpush1.msra.mxu0 %v1211
    %1545 = vmatprep.subr.mxu0 0.0
    %1546 = vmatpush1.msra.mxu0 %v1212
    %1547 = vmatprep.subr.mxu0 0.0
    %1548 = vmatpush1.msra.mxu0 %v1213
    %1549 = vmatprep.subr.mxu0 0.0
    %1550 = vmatpush1.msra.mxu0 %v1214
    %1551 = vmatprep.subr.mxu0 0.0
    %1552 = vmatpush1.msra.mxu0 0.0
    %1553 = vmatprep.subr.mxu0 0.0
    %1554 = vmatpush1.msra.mxu0 0.0
    %1555 = vmatprep.subr.mxu0 0.0
    %1556 = vmatpush1.msra.mxu0 0.0
    %1557 = vmatprep.subr.mxu0 0.0
    %1558 = vmatpush1.msra.mxu0 0.0
    %1559 = vmatprep.subr.mxu0 0.0
    %1560 = vmatpush1.msra.mxu0 0.0
    %1561 = vmatprep.subr.mxu0 0.0
    %1562 = vmatpush1.msra.mxu0 0.0
    %1563 = vmatprep.subr.mxu0 0.0
    %1564 = vmatpush1.msra.mxu0 0.0
    %1565 = vmatprep.subr.mxu0 0.0
    %1566 = vmatpush1.msra.mxu0 0.0
    %1567 = vmatprep.subr.mxu0 0.0
    %1568 = vmatpush1.msra.mxu0 0.0
    %1569 = vmatprep.subr.mxu0 0.0
    %1570 = vmatpush1.msra.mxu0 0.0
    %1571 = vmatprep.subr.mxu0 0.0
    %1572 = vmatpush1.msra.mxu0 0.0
    %1573 = vmatprep.subr.mxu0 0.0
    %1574 = vmatpush1.msra.mxu0 0.0
    %1575 = vmatprep.subr.mxu0 0.0
    %1576 = vmatpush1.msra.mxu0 0.0
    %1577 = vmatprep.subr.mxu0 0.0
    %1578 = vmatpush1.msra.mxu0 0.0
    %1579 = vmatprep.subr.mxu0 0.0
    %1580 = vmatpush1.msra.mxu0 0.0
    %1581 = vmatprep.subr.mxu0 0.0
    %1582 = vmatpush1.msra.mxu0 0.0
    %1583 = vmatprep.subr.mxu0 0.0
    %1584 = vmatpush1.msra.mxu0 0.0
    %1585 = vmatprep.subr.mxu0 0.0
    %1586 = vmatpush1.msra.mxu0 0.0
    %1587 = vmatprep.subr.mxu0 0.0
    %1588 = vmatpush1.msra.mxu0 0.0
    %1589 = vmatprep.subr.mxu0 0.0
    %1590 = vmatpush1.msra.mxu0 0.0
    %1591 = vmatprep.subr.mxu0 0.0
    %1592 = vmatpush1.msra.mxu0 0.0
    %1593 = vmatprep.subr.mxu0 0.0
    %1594 = vmatpush1.msra.mxu0 0.0
    %1595 = vmatprep.subr.mxu0 0.0
    %1596 = vmatpush1.msra.mxu0 0.0
    %1597 = vmatprep.subr.mxu0 0.0
    %1598 = vmatpush1.msra.mxu0 0.0
    %1599 = vmatprep.subr.mxu0 0.0
    %1600 = vmatpush1.msra.mxu0 0.0
    %1601 = vmatprep.subr.mxu0 0.0
    %1602 = vmatpush1.msra.mxu0 0.0
    %1603 = vmatprep.subr.mxu0 0.0
    %1604 = vmatpush1.msra.mxu0 0.0
    %1605 = vmatprep.subr.mxu0 0.0
    %1606 = vmatpush1.msra.mxu0 0.0
    %1607 = vmatprep.mubr.f32.mxu0 0.0
    %1608 = vmatmul.mubr.f32.gmra.mrb[0].mxu0 %v1541
    %v1609 = vpop.f32.mrb[0].mxu0
    %v1610 = vadd.f32 0.0, %v1609
    %v1611 = vpop.f32.mrb[0].mxu0
    %1612 = vdwg.mxu0
    %v1613 = vadd.f32 %v1537, %v1610
    %v1614 = vxor.u32 %v1613, 2147483648
    %v1615 = vmul.f32 %v1614, 1.442695
    %v1616 = vpow.pop %v1615
    %v1617 = vadd.f32 %v1616, 1.0
    %v1618 = vrcp.pop %v1617
    %v1619 = vmul.f32 1.0, %v1618
    %v1620 = vadd.f32 %v1610, %v1300
    %1622 = vrot.lane.b32.xlu0 %v1620, 64
    %v1623 = vpop.permute.xlu0 %1622
    %v1625 = vmul.f32 %v1619, %v1623
    %1627 = vrot.lane.b32.xlu0 %v1625, 64
    %v1628 = vpop.permute.xlu0 %1627
    %v1630 = vadd.f32 %v1537, %v1628
    %v1631 = vtanh.pop %v1630
    %v1632 = vsub.f32 %v1536, %v1631
    %1634 = vrot.lane.b32.xlu0 %v1632, 96
    %v1635 = vpop.permute.xlu0 %1634
    %v1637 = vmul.f32 %v1619, %v1635
    %1639 = vrot.lane.b32.xlu0 %v1637, 32
    %v1640 = vpop.permute.xlu0 %1639
    %v1642 = vadd.f32 %v1631, %v1640
    %v1643 = vld [vmem:[#allocation2 + $0x10] sm:$0xf]
    %1645 = vrot.lane.b32.xlu0 %v1642, 64
    %v1646 = vpop.permute.xlu0 %1645
    %v1647 = vsel %vm226, %v1646, 0
    %1649 = vmatprep.subr.mxu0 0.0
    %1650 = vmatpush1.msra.mxu0 %v1211
    %1651 = vmatprep.subr.mxu0 0.0
    %1652 = vmatpush1.msra.mxu0 %v1212
    %1653 = vmatprep.subr.mxu0 0.0
    %1654 = vmatpush1.msra.mxu0 %v1213
    %1655 = vmatprep.subr.mxu0 0.0
    %1656 = vmatpush1.msra.mxu0 %v1214
    %1657 = vmatprep.subr.mxu0 0.0
    %1658 = vmatpush1.msra.mxu0 0.0
    %1659 = vmatprep.subr.mxu0 0.0
    %1660 = vmatpush1.msra.mxu0 0.0
    %1661 = vmatprep.subr.mxu0 0.0
    %1662 = vmatpush1.msra.mxu0 0.0
    %1663 = vmatprep.subr.mxu0 0.0
    %1664 = vmatpush1.msra.mxu0 0.0
    %1665 = vmatprep.subr.mxu0 0.0
    %1666 = vmatpush1.msra.mxu0 0.0
    %1667 = vmatprep.subr.mxu0 0.0
    %1668 = vmatpush1.msra.mxu0 0.0
    %1669 = vmatprep.subr.mxu0 0.0
    %1670 = vmatpush1.msra.mxu0 0.0
    %1671 = vmatprep.subr.mxu0 0.0
    %1672 = vmatpush1.msra.mxu0 0.0
    %1673 = vmatprep.subr.mxu0 0.0
    %1674 = vmatpush1.msra.mxu0 0.0
    %1675 = vmatprep.subr.mxu0 0.0
    %1676 = vmatpush1.msra.mxu0 0.0
    %1677 = vmatprep.subr.mxu0 0.0
    %1678 = vmatpush1.msra.mxu0 0.0
    %1679 = vmatprep.subr.mxu0 0.0
    %1680 = vmatpush1.msra.mxu0 0.0
    %1681 = vmatprep.subr.mxu0 0.0
    %1682 = vmatpush1.msra.mxu0 0.0
    %1683 = vmatprep.subr.mxu0 0.0
    %1684 = vmatpush1.msra.mxu0 0.0
    %1685 = vmatprep.subr.mxu0 0.0
    %1686 = vmatpush1.msra.mxu0 0.0
    %1687 = vmatprep.subr.mxu0 0.0
    %1688 = vmatpush1.msra.mxu0 0.0
    %1689 = vmatprep.subr.mxu0 0.0
    %1690 = vmatpush1.msra.mxu0 0.0
    %1691 = vmatprep.subr.mxu0 0.0
    %1692 = vmatpush1.msra.mxu0 0.0
    %1693 = vmatprep.subr.mxu0 0.0
    %1694 = vmatpush1.msra.mxu0 0.0
    %1695 = vmatprep.subr.mxu0 0.0
    %1696 = vmatpush1.msra.mxu0 0.0
    %1697 = vmatprep.subr.mxu0 0.0
    %1698 = vmatpush1.msra.mxu0 0.0
    %1699 = vmatprep.subr.mxu0 0.0
    %1700 = vmatpush1.msra.mxu0 0.0
    %1701 = vmatprep.subr.mxu0 0.0
    %1702 = vmatpush1.msra.mxu0 0.0
    %1703 = vmatprep.subr.mxu0 0.0
    %1704 = vmatpush1.msra.mxu0 0.0
    %1705 = vmatprep.subr.mxu0 0.0
    %1706 = vmatpush1.msra.mxu0 0.0
    %1707 = vmatprep.subr.mxu0 0.0
    %1708 = vmatpush1.msra.mxu0 0.0
    %1709 = vmatprep.subr.mxu0 0.0
    %1710 = vmatpush1.msra.mxu0 0.0
    %1711 = vmatprep.subr.mxu0 0.0
    %1712 = vmatpush1.msra.mxu0 0.0
    %1713 = vmatprep.mubr.f32.mxu0 0.0
    %1714 = vmatmul.mubr.f32.gmra.mrb[0].mxu0 %v1647
    %v1715 = vpop.f32.mrb[0].mxu0
    %v1716 = vadd.f32 0.0, %v1715
    %v1717 = vpop.f32.mrb[0].mxu0
    %1718 = vdwg.mxu0
    %v1719 = vadd.f32 %v1643, %v1716
    %v1720 = vxor.u32 %v1719, 2147483648
    %v1721 = vmul.f32 %v1720, 1.442695
    %v1722 = vpow.pop %v1721
    %v1723 = vadd.f32 %v1722, 1.0
    %v1724 = vrcp.pop %v1723
    %v1725 = vmul.f32 1.0, %v1724
    %v1726 = vadd.f32 %v1716, %v1300
    %1728 = vrot.lane.b32.xlu0 %v1726, 64
    %v1729 = vpop.permute.xlu0 %1728
    %v1731 = vmul.f32 %v1725, %v1729
    %1733 = vrot.lane.b32.xlu0 %v1731, 64
    %v1734 = vpop.permute.xlu0 %1733
    %v1736 = vadd.f32 %v1643, %v1734
    %v1737 = vtanh.pop %v1736
    %v1738 = vsub.f32 %v1642, %v1737
    %1740 = vrot.lane.b32.xlu0 %v1738, 96
    %v1741 = vpop.permute.xlu0 %1740
    %v1743 = vmul.f32 %v1725, %v1741
    %1745 = vrot.lane.b32.xlu0 %v1743, 32
    %v1746 = vpop.permute.xlu0 %1745
    %v1748 = vadd.f32 %v1737, %v1746
    %v1749 = vld [vmem:[#allocation2 + $0x14] sm:$0xf]
    %1751 = vrot.lane.b32.xlu0 %v1748, 64
    %v1752 = vpop.permute.xlu0 %1751
    %v1753 = vsel %vm226, %v1752, 0
    %1755 = vmatprep.subr.mxu0 0.0
    %1756 = vmatpush1.msra.mxu0 %v1211
    %1757 = vmatprep.subr.mxu0 0.0
    %1758 = vmatpush1.msra.mxu0 %v1212
    %1759 = vmatprep.subr.mxu0 0.0
    %1760 = vmatpush1.msra.mxu0 %v1213
    %1761 = vmatprep.subr.mxu0 0.0
    %1762 = vmatpush1.msra.mxu0 %v1214
    %1763 = vmatprep.subr.mxu0 0.0
    %1764 = vmatpush1.msra.mxu0 0.0
    %1765 = vmatprep.subr.mxu0 0.0
    %1766 = vmatpush1.msra.mxu0 0.0
    %1767 = vmatprep.subr.mxu0 0.0
    %1768 = vmatpush1.msra.mxu0 0.0
    %1769 = vmatprep.subr.mxu0 0.0
    %1770 = vmatpush1.msra.mxu0 0.0
    %1771 = vmatprep.subr.mxu0 0.0
    %1772 = vmatpush1.msra.mxu0 0.0
    %1773 = vmatprep.subr.mxu0 0.0
    %1774 = vmatpush1.msra.mxu0 0.0
    %1775 = vmatprep.subr.mxu0 0.0
    %1776 = vmatpush1.msra.mxu0 0.0
    %1777 = vmatprep.subr.mxu0 0.0
    %1778 = vmatpush1.msra.mxu0 0.0
    %1779 = vmatprep.subr.mxu0 0.0
    %1780 = vmatpush1.msra.mxu0 0.0
    %1781 = vmatprep.subr.mxu0 0.0
    %1782 = vmatpush1.msra.mxu0 0.0
    %1783 = vmatprep.subr.mxu0 0.0
    %1784 = vmatpush1.msra.mxu0 0.0
    %1785 = vmatprep.subr.mxu0 0.0
    %1786 = vmatpush1.msra.mxu0 0.0
    %1787 = vmatprep.subr.mxu0 0.0
    %1788 = vmatpush1.msra.mxu0 0.0
    %1789 = vmatprep.subr.mxu0 0.0
    %1790 = vmatpush1.msra.mxu0 0.0
    %1791 = vmatprep.subr.mxu0 0.0
    %1792 = vmatpush1.msra.mxu0 0.0
    %1793 = vmatprep.subr.mxu0 0.0
    %1794 = vmatpush1.msra.mxu0 0.0
    %1795 = vmatprep.subr.mxu0 0.0
    %1796 = vmatpush1.msra.mxu0 0.0
    %1797 = vmatprep.subr.mxu0 0.0
    %1798 = vmatpush1.msra.mxu0 0.0
    %1799 = vmatprep.subr.mxu0 0.0
    %1800 = vmatpush1.msra.mxu0 0.0
    %1801 = vmatprep.subr.mxu0 0.0
    %1802 = vmatpush1.msra.mxu0 0.0
    %1803 = vmatprep.subr.mxu0 0.0
    %1804 = vmatpush1.msra.mxu0 0.0
    %1805 = vmatprep.subr.mxu0 0.0
    %1806 = vmatpush1.msra.mxu0 0.0
    %1807 = vmatprep.subr.mxu0 0.0
    %1808 = vmatpush1.msra.mxu0 0.0
    %1809 = vmatprep.subr.mxu0 0.0
    %1810 = vmatpush1.msra.mxu0 0.0
    %1811 = vmatprep.subr.mxu0 0.0
    %1812 = vmatpush1.msra.mxu0 0.0
    %1813 = vmatprep.subr.mxu0 0.0
    %1814 = vmatpush1.msra.mxu0 0.0
    %1815 = vmatprep.subr.mxu0 0.0
    %1816 = vmatpush1.msra.mxu0 0.0
    %1817 = vmatprep.subr.mxu0 0.0
    %1818 = vmatpush1.msra.mxu0 0.0
    %1819 = vmatprep.mubr.f32.mxu0 0.0
    %1820 = vmatmul.mubr.f32.gmra.mrb[0].mxu0 %v1753
    %v1821 = vpop.f32.mrb[0].mxu0
    %v1822 = vadd.f32 0.0, %v1821
    %v1823 = vpop.f32.mrb[0].mxu0
    %1824 = vdwg.mxu0
    %v1825 = vadd.f32 %v1749, %v1822
    %v1826 = vxor.u32 %v1825, 2147483648
    %v1827 = vmul.f32 %v1826, 1.442695
    %v1828 = vpow.pop %v1827
    %v1829 = vadd.f32 %v1828, 1.0
    %v1830 = vrcp.pop %v1829
    %v1831 = vmul.f32 1.0, %v1830
    %v1832 = vadd.f32 %v1822, %v1300
    %1834 = vrot.lane.b32.xlu0 %v1832, 64
    %v1835 = vpop.permute.xlu0 %1834
    %v1837 = vmul.f32 %v1831, %v1835
    %1839 = vrot.lane.b32.xlu0 %v1837, 64
    %v1840 = vpop.permute.xlu0 %1839
    %v1842 = vadd.f32 %v1749, %v1840
    %v1843 = vtanh.pop %v1842
    %v1844 = vsub.f32 %v1748, %v1843
    %1846 = vrot.lane.b32.xlu0 %v1844, 96
    %v1847 = vpop.permute.xlu0 %1846
    %v1849 = vmul.f32 %v1831, %v1847
    %1851 = vrot.lane.b32.xlu0 %v1849, 32
    %v1852 = vpop.permute.xlu0 %1851
    %v1854 = vadd.f32 %v1843, %v1852
    %v1855 = vld [vmem:[#allocation2 + $0x18] sm:$0xf]
    %1857 = vrot.lane.b32.xlu0 %v1854, 64
    %v1858 = vpop.permute.xlu0 %1857
    %v1859 = vsel %vm226, %v1858, 0
    %1861 = vmatprep.subr.mxu0 0.0
    %1862 = vmatpush1.msra.mxu0 %v1211
    %1863 = vmatprep.subr.mxu0 0.0
    %1864 = vmatpush1.msra.mxu0 %v1212
    %1865 = vmatprep.subr.mxu0 0.0
    %1866 = vmatpush1.msra.mxu0 %v1213
    %1867 = vmatprep.subr.mxu0 0.0
    %1868 = vmatpush1.msra.mxu0 %v1214
    %1869 = vmatprep.subr.mxu0 0.0
    %1870 = vmatpush1.msra.mxu0 0.0
    %1871 = vmatprep.subr.mxu0 0.0
    %1872 = vmatpush1.msra.mxu0 0.0
    %1873 = vmatprep.subr.mxu0 0.0
    %1874 = vmatpush1.msra.mxu0 0.0
    %1875 = vmatprep.subr.mxu0 0.0
    %1876 = vmatpush1.msra.mxu0 0.0
    %1877 = vmatprep.subr.mxu0 0.0
    %1878 = vmatpush1.msra.mxu0 0.0
    %1879 = vmatprep.subr.mxu0 0.0
    %1880 = vmatpush1.msra.mxu0 0.0
    %1881 = vmatprep.subr.mxu0 0.0
    %1882 = vmatpush1.msra.mxu0 0.0
    %1883 = vmatprep.subr.mxu0 0.0
    %1884 = vmatpush1.msra.mxu0 0.0
    %1885 = vmatprep.subr.mxu0 0.0
    %1886 = vmatpush1.msra.mxu0 0.0
    %1887 = vmatprep.subr.mxu0 0.0
    %1888 = vmatpush1.msra.mxu0 0.0
    %1889 = vmatprep.subr.mxu0 0.0
    %1890 = vmatpush1.msra.mxu0 0.0
    %1891 = vmatprep.subr.mxu0 0.0
    %1892 = vmatpush1.msra.mxu0 0.0
    %1893 = vmatprep.subr.mxu0 0.0
    %1894 = vmatpush1.msra.mxu0 0.0
    %1895 = vmatprep.subr.mxu0 0.0
    %1896 = vmatpush1.msra.mxu0 0.0
    %1897 = vmatprep.subr.mxu0 0.0
    %1898 = vmatpush1.msra.mxu0 0.0
    %1899 = vmatprep.subr.mxu0 0.0
    %1900 = vmatpush1.msra.mxu0 0.0
    %1901 = vmatprep.subr.mxu0 0.0
    %1902 = vmatpush1.msra.mxu0 0.0
    %1903 = vmatprep.subr.mxu0 0.0
    %1904 = vmatpush1.msra.mxu0 0.0
    %1905 = vmatprep.subr.mxu0 0.0
    %1906 = vmatpush1.msra.mxu0 0.0
    %1907 = vmatprep.subr.mxu0 0.0
    %1908 = vmatpush1.msra.mxu0 0.0
    %1909 = vmatprep.subr.mxu0 0.0
    %1910 = vmatpush1.msra.mxu0 0.0
    %1911 = vmatprep.subr.mxu0 0.0
    %1912 = vmatpush1.msra.mxu0 0.0
    %1913 = vmatprep.subr.mxu0 0.0
    %1914 = vmatpush1.msra.mxu0 0.0
    %1915 = vmatprep.subr.mxu0 0.0
    %1916 = vmatpush1.msra.mxu0 0.0
    %1917 = vmatprep.subr.mxu0 0.0
    %1918 = vmatpush1.msra.mxu0 0.0
    %1919 = vmatprep.subr.mxu0 0.0
    %1920 = vmatpush1.msra.mxu0 0.0
    %1921 = vmatprep.subr.mxu0 0.0
    %1922 = vmatpush1.msra.mxu0 0.0
    %1923 = vmatprep.subr.mxu0 0.0
    %1924 = vmatpush1.msra.mxu0 0.0
    %1925 = vmatprep.mubr.f32.mxu0 0.0
    %1926 = vmatmul.mubr.f32.gmra.mrb[0].mxu0 %v1859
    %v1927 = vpop.f32.mrb[0].mxu0
    %v1928 = vadd.f32 0.0, %v1927
    %v1929 = vpop.f32.mrb[0].mxu0
    %1930 = vdwg.mxu0
    %v1931 = vadd.f32 %v1855, %v1928
    %v1932 = vxor.u32 %v1931, 2147483648
    %v1933 = vmul.f32 %v1932, 1.442695
    %v1934 = vpow.pop %v1933
    %v1935 = vadd.f32 %v1934, 1.0
    %v1936 = vrcp.pop %v1935
    %v1937 = vmul.f32 1.0, %v1936
    %v1938 = vadd.f32 %v1928, %v1300
    %1940 = vrot.lane.b32.xlu0 %v1938, 64
    %v1941 = vpop.permute.xlu0 %1940
    %v1943 = vmul.f32 %v1937, %v1941
    %1945 = vrot.lane.b32.xlu0 %v1943, 64
    %v1946 = vpop.permute.xlu0 %1945
    %v1948 = vadd.f32 %v1855, %v1946
    %v1949 = vtanh.pop %v1948
    %v1950 = vsub.f32 %v1854, %v1949
    %1952 = vrot.lane.b32.xlu0 %v1950, 96
    %v1953 = vpop.permute.xlu0 %1952
    %v1955 = vmul.f32 %v1937, %v1953
    %1957 = vrot.lane.b32.xlu0 %v1955, 32
    %v1958 = vpop.permute.xlu0 %1957
    %v1960 = vadd.f32 %v1949, %v1958
    %v1961 = vld [vmem:[#allocation2 + $0x1c] sm:$0xf]
    %1963 = vrot.lane.b32.xlu0 %v1960, 64
    %v1964 = vpop.permute.xlu0 %1963
    %v1965 = vsel %vm226, %v1964, 0
    %1967 = vmatprep.subr.mxu0 0.0
    %1968 = vmatpush1.msra.mxu0 %v1211
    %1969 = vmatprep.subr.mxu0 0.0
    %1970 = vmatpush1.msra.mxu0 %v1212
    %1971 = vmatprep.subr.mxu0 0.0
    %1972 = vmatpush1.msra.mxu0 %v1213
    %1973 = vmatprep.subr.mxu0 0.0
    %1974 = vmatpush1.msra.mxu0 %v1214
    %1975 = vmatprep.subr.mxu0 0.0
    %1976 = vmatpush1.msra.mxu0 0.0
    %1977 = vmatprep.subr.mxu0 0.0
    %1978 = vmatpush1.msra.mxu0 0.0
    %1979 = vmatprep.subr.mxu0 0.0
    %1980 = vmatpush1.msra.mxu0 0.0
    %1981 = vmatprep.subr.mxu0 0.0
    %1982 = vmatpush1.msra.mxu0 0.0
    %1983 = vmatprep.subr.mxu0 0.0
    %1984 = vmatpush1.msra.mxu0 0.0
    %1985 = vmatprep.subr.mxu0 0.0
    %1986 = vmatpush1.msra.mxu0 0.0
    %1987 = vmatprep.subr.mxu0 0.0
    %1988 = vmatpush1.msra.mxu0 0.0
    %1989 = vmatprep.subr.mxu0 0.0
    %1990 = vmatpush1.msra.mxu0 0.0
    %1991 = vmatprep.subr.mxu0 0.0
    %1992 = vmatpush1.msra.mxu0 0.0
    %1993 = vmatprep.subr.mxu0 0.0
    %1994 = vmatpush1.msra.mxu0 0.0
    %1995 = vmatprep.subr.mxu0 0.0
    %1996 = vmatpush1.msra.mxu0 0.0
    %1997 = vmatprep.subr.mxu0 0.0
    %1998 = vmatpush1.msra.mxu0 0.0
    %1999 = vmatprep.subr.mxu0 0.0
    %2000 = vmatpush1.msra.mxu0 0.0
    %2001 = vmatprep.subr.mxu0 0.0
    %2002 = vmatpush1.msra.mxu0 0.0
    %2003 = vmatprep.subr.mxu0 0.0
    %2004 = vmatpush1.msra.mxu0 0.0
    %2005 = vmatprep.subr.mxu0 0.0
    %2006 = vmatpush1.msra.mxu0 0.0
    %2007 = vmatprep.subr.mxu0 0.0
    %2008 = vmatpush1.msra.mxu0 0.0
    %2009 = vmatprep.subr.mxu0 0.0
    %2010 = vmatpush1.msra.mxu0 0.0
    %2011 = vmatprep.subr.mxu0 0.0
    %2012 = vmatpush1.msra.mxu0 0.0
    %2013 = vmatprep.subr.mxu0 0.0
    %2014 = vmatpush1.msra.mxu0 0.0
    %2015 = vmatprep.subr.mxu0 0.0
    %2016 = vmatpush1.msra.mxu0 0.0
    %2017 = vmatprep.subr.mxu0 0.0
    %2018 = vmatpush1.msra.mxu0 0.0
    %2019 = vmatprep.subr.mxu0 0.0
    %2020 = vmatpush1.msra.mxu0 0.0
    %2021 = vmatprep.subr.mxu0 0.0
    %2022 = vmatpush1.msra.mxu0 0.0
    %2023 = vmatprep.subr.mxu0 0.0
    %2024 = vmatpush1.msra.mxu0 0.0
    %2025 = vmatprep.subr.mxu0 0.0
    %2026 = vmatpush1.msra.mxu0 0.0
    %2027 = vmatprep.subr.mxu0 0.0
    %2028 = vmatpush1.msra.mxu0 0.0
    %2029 = vmatprep.subr.mxu0 0.0
    %2030 = vmatpush1.msra.mxu0 0.0
    %2031 = vmatprep.mubr.f32.mxu0 0.0
    %2032 = vmatmul.mubr.f32.gmra.mrb[0].mxu0 %v1965
    %v2033 = vpop.f32.mrb[0].mxu0
    %v2034 = vadd.f32 0.0, %v2033
    %v2035 = vpop.f32.mrb[0].mxu0
    %2036 = vdwg.mxu0
    %v2037 = vadd.f32 %v1961, %v2034
    %v2038 = vxor.u32 %v2037, 2147483648
    %v2039 = vmul.f32 %v2038, 1.442695
    %v2040 = vpow.pop %v2039
    %v2041 = vadd.f32 %v2040, 1.0
    %v2042 = vrcp.pop %v2041
    %v2043 = vmul.f32 1.0, %v2042
    %v2044 = vadd.f32 %v2034, %v1300
    %2046 = vrot.lane.b32.xlu0 %v2044, 64
    %v2047 = vpop.permute.xlu0 %2046
    %v2049 = vmul.f32 %v2043, %v2047
    %2051 = vrot.lane.b32.xlu0 %v2049, 64
    %v2052 = vpop.permute.xlu0 %2051
    %v2054 = vadd.f32 %v1961, %v2052
    %v2055 = vtanh.pop %v2054
    %v2056 = vsub.f32 %v1960, %v2055
    %2058 = vrot.lane.b32.xlu0 %v2056, 96
    %v2059 = vpop.permute.xlu0 %2058
    %v2061 = vmul.f32 %v2043, %v2059
    %2063 = vrot.lane.b32.xlu0 %v2061, 32
    %v2064 = vpop.permute.xlu0 %2063
    %v2066 = vadd.f32 %v2055, %v2064
    %v2067 = vld [vmem:[%s10] sm:$0xff]
    %v2068 = vld [vmem:[%s10 + $0x8] sm:$0xff]
    %v2069 = vld [vmem:[%s10 + $0x10] sm:$0xff]
    %v2070 = vld [vmem:[%s10 + $0x18] sm:$0xff]
    %v2071 = vld [vmem:[%s9] sm:$0xf]
    %v2072 = vld [vmem:[%s11] sm:$0xff]
    %vm2073 = vcmask 64512
    %v2075 = vsel %vm2073, %v2071, 0
    %2077 = vmatprep.subr.mxu0 0.0
    %2078 = vmatpush1.msra.mxu0 %v2072
    %2079 = vmatprep.subr.mxu0 0.0
    %2080 = vmatpush1.msra.mxu0 0.0
    %2081 = vmatprep.subr.mxu0 0.0
    %2082 = vmatpush1.msra.mxu0 0.0
    %2083 = vmatprep.subr.mxu0 0.0
    %2084 = vmatpush1.msra.mxu0 0.0
    %2085 = vmatprep.subr.mxu0 0.0
    %2086 = vmatpush1.msra.mxu0 0.0
    %2087 = vmatprep.subr.mxu0 0.0
    %2088 = vmatpush1.msra.mxu0 0.0
    %2089 = vmatprep.subr.mxu0 0.0
    %2090 = vmatpush1.msra.mxu0 0.0
    %2091 = vmatprep.subr.mxu0 0.0
    %2092 = vmatpush1.msra.mxu0 0.0
    %2093 = vmatprep.subr.mxu0 0.0
    %2094 = vmatpush1.msra.mxu0 0.0
    %2095 = vmatprep.subr.mxu0 0.0
    %2096 = vmatpush1.msra.mxu0 0.0
    %2097 = vmatprep.subr.mxu0 0.0
    %2098 = vmatpush1.msra.mxu0 0.0
    %2099 = vmatprep.subr.mxu0 0.0
    %2100 = vmatpush1.msra.mxu0 0.0
    %2101 = vmatprep.subr.mxu0 0.0
    %2102 = vmatpush1.msra.mxu0 0.0
    %2103 = vmatprep.subr.mxu0 0.0
    %2104 = vmatpush1.msra.mxu0 0.0
    %2105 = vmatprep.subr.mxu0 0.0
    %2106 = vmatpush1.msra.mxu0 0.0
    %2107 = vmatprep.subr.mxu0 0.0
    %2108 = vmatpush1.msra.mxu0 0.0
    %2109 = vmatprep.subr.mxu0 0.0
    %2110 = vmatpush1.msra.mxu0 0.0
    %2111 = vmatprep.subr.mxu0 0.0
    %2112 = vmatpush1.msra.mxu0 0.0
    %2113 = vmatprep.subr.mxu0 0.0
    %2114 = vmatpush1.msra.mxu0 0.0
    %2115 = vmatprep.subr.mxu0 0.0
    %2116 = vmatpush1.msra.mxu0 0.0
    %2117 = vmatprep.subr.mxu0 0.0
    %2118 = vmatpush1.msra.mxu0 0.0
    %2119 = vmatprep.subr.mxu0 0.0
    %2120 = vmatpush1.msra.mxu0 0.0
    %2121 = vmatprep.subr.mxu0 0.0
    %2122 = vmatpush1.msra.mxu0 0.0
    %2123 = vmatprep.subr.mxu0 0.0
    %2124 = vmatpush1.msra.mxu0 0.0
    %2125 = vmatprep.subr.mxu0 0.0
    %2126 = vmatpush1.msra.mxu0 0.0
    %2127 = vmatprep.subr.mxu0 0.0
    %2128 = vmatpush1.msra.mxu0 0.0
    %2129 = vmatprep.subr.mxu0 0.0
    %2130 = vmatpush1.msra.mxu0 0.0
    %2131 = vmatprep.subr.mxu0 0.0
    %2132 = vmatpush1.msra.mxu0 0.0
    %2133 = vmatprep.subr.mxu0 0.0
    %2134 = vmatpush1.msra.mxu0 0.0
    %2135 = vmatprep.subr.mxu0 0.0
    %2136 = vmatpush1.msra.mxu0 0.0
    %2137 = vmatprep.subr.mxu0 0.0
    %2138 = vmatpush1.msra.mxu0 0.0
    %2139 = vmatprep.subr.mxu0 0.0
    %2140 = vmatpush1.msra.mxu0 0.0
    %2141 = vmatprep.mubr.f32.mxu0 0.0
    %2142 = vmatmul.mubr.f32.gmra.mrb[0].mxu0 %v2075
    %v2143 = vpop.f32.mrb[0].mxu0
    %v2144 = vadd.f32 0.0, %v2143
    %v2145 = vpop.f32.mrb[0].mxu0
    %2146 = vdwg.mxu0
    %2148 = vrot.lane.b32.xlu0 %v2066, 64
    %v2149 = vpop.permute.xlu0 %2148
    %v2150 = vsel %vm226, %v2149, 0
    %2152 = vmatprep.subr.mxu0 0.0
    %2153 = vmatpush1.msra.mxu0 %v2067
    %2154 = vmatprep.subr.mxu0 0.0
    %2155 = vmatpush1.msra.mxu0 %v2068
    %2156 = vmatprep.subr.mxu0 0.0
    %2157 = vmatpush1.msra.mxu0 %v2069
    %2158 = vmatprep.subr.mxu0 0.0
    %2159 = vmatpush1.msra.mxu0 %v2070
    %2160 = vmatprep.subr.mxu0 0.0
    %2161 = vmatpush1.msra.mxu0 0.0
    %2162 = vmatprep.subr.mxu0 0.0
    %2163 = vmatpush1.msra.mxu0 0.0
    %2164 = vmatprep.subr.mxu0 0.0
    %2165 = vmatpush1.msra.mxu0 0.0
    %2166 = vmatprep.subr.mxu0 0.0
    %2167 = vmatpush1.msra.mxu0 0.0
    %2168 = vmatprep.subr.mxu0 0.0
    %2169 = vmatpush1.msra.mxu0 0.0
    %2170 = vmatprep.subr.mxu0 0.0
    %2171 = vmatpush1.msra.mxu0 0.0
    %2172 = vmatprep.subr.mxu0 0.0
    %2173 = vmatpush1.msra.mxu0 0.0
    %2174 = vmatprep.subr.mxu0 0.0
    %2175 = vmatpush1.msra.mxu0 0.0
    %2176 = vmatprep.subr.mxu0 0.0
    %2177 = vmatpush1.msra.mxu0 0.0
    %2178 = vmatprep.subr.mxu0 0.0
    %2179 = vmatpush1.msra.mxu0 0.0
    %2180 = vmatprep.subr.mxu0 0.0
    %2181 = vmatpush1.msra.mxu0 0.0
    %2182 = vmatprep.subr.mxu0 0.0
    %2183 = vmatpush1.msra.mxu0 0.0
    %2184 = vmatprep.subr.mxu0 0.0
    %2185 = vmatpush1.msra.mxu0 0.0
    %2186 = vmatprep.subr.mxu0 0.0
    %2187 = vmatpush1.msra.mxu0 0.0
    %2188 = vmatprep.subr.mxu0 0.0
    %2189 = vmatpush1.msra.mxu0 0.0
    %2190 = vmatprep.subr.mxu0 0.0
    %2191 = vmatpush1.msra.mxu0 0.0
    %2192 = vmatprep.subr.mxu0 0.0
    %2193 = vmatpush1.msra.mxu0 0.0
    %2194 = vmatprep.subr.mxu0 0.0
    %2195 = vmatpush1.msra.mxu0 0.0
    %2196 = vmatprep.subr.mxu0 0.0
    %2197 = vmatpush1.msra.mxu0 0.0
    %2198 = vmatprep.subr.mxu0 0.0
    %2199 = vmatpush1.msra.mxu0 0.0
    %2200 = vmatprep.subr.mxu0 0.0
    %2201 = vmatpush1.msra.mxu0 0.0
    %2202 = vmatprep.subr.mxu0 0.0
    %2203 = vmatpush1.msra.mxu0 0.0
    %2204 = vmatprep.subr.mxu0 0.0
    %2205 = vmatpush1.msra.mxu0 0.0
    %2206 = vmatprep.subr.mxu0 0.0
    %2207 = vmatpush1.msra.mxu0 0.0
    %2208 = vmatprep.subr.mxu0 0.0
    %2209 = vmatpush1.msra.mxu0 0.0
    %2210 = vmatprep.subr.mxu0 0.0
    %2211 = vmatpush1.msra.mxu0 0.0
    %2212 = vmatprep.subr.mxu0 0.0
    %2213 = vmatpush1.msra.mxu0 0.0
    %2214 = vmatprep.subr.mxu0 0.0
    %2215 = vmatpush1.msra.mxu0 0.0
    %2216 = vmatprep.mubr.f32.mxu0 0.0
    %2217 = vmatmul.mubr.f32.gmra.mrb[0].mxu0 %v2150
    %v2218 = vpop.f32.mrb[0].mxu0
    %v2219 = vadd.f32 %v2144, %v2218
    %v2220 = vpop.f32.mrb[0].mxu0
    %2221 = vdwg.mxu0
    %v2222 = vld [vmem:[%s12] sm:$0x1]
    %v2224 = vlaneseq
    %v2225 = vshrl.u32 %v2224, 7
    %v2226 = vsub.s32 0, %v2225
    %v2227 = vrot.slane %v2222, %v2226
    %v2229 = vadd.f32 %v2219, %v2227
    %v2230 = vmax.f32 %v2229, 0.0
    %v2231 = vld [vmem:[%s13] sm:$0xff]
    %v2232 = vld [vmem:[%s13 + $0x8] sm:$0xff]
    %v2233 = vld [vmem:[%s13 + $0x10] sm:$0xff]
    %v2234 = vld [vmem:[%s13 + $0x18] sm:$0xff]
    %v2235 = vld [vmem:[%s13 + $0x20] sm:$0xff]
    %v2236 = vld [vmem:[%s13 + $0x28] sm:$0xff]
    %v2237 = vld [vmem:[%s13 + $0x30] sm:$0xff]
    %v2238 = vld [vmem:[%s13 + $0x38] sm:$0xff]
    %v2239 = vld [vmem:[%s14] sm:$0x1]
    %v2241 = vlaneseq
    %v2242 = vshrl.u32 %v2241, 7
    %v2243 = vsub.s32 0, %v2242
    %v2244 = vrot.slane %v2239, %v2243
    %vm2246 = vcmask 523264
    %v2248 = vsel %vm2246, %v2230, 0
    %2250 = vmatprep.subr.mxu0 0.0
    %2251 = vmatpush1.msra.mxu0 %v2231
    %2252 = vmatprep.subr.mxu0 0.0
    %2253 = vmatpush1.msra.mxu0 %v2232
    %2254 = vmatprep.subr.mxu0 0.0
    %2255 = vmatpush1.msra.mxu0 %v2233
    %2256 = vmatprep.subr.mxu0 0.0
    %2257 = vmatpush1.msra.mxu0 %v2234
    %2258 = vmatprep.subr.mxu0 0.0
    %2259 = vmatpush1.msra.mxu0 %v2235
    %2260 = vmatprep.subr.mxu0 0.0
    %2261 = vmatpush1.msra.mxu0 %v2236
    %2262 = vmatprep.subr.mxu0 0.0
    %2263 = vmatpush1.msra.mxu0 %v2237
    %2264 = vmatprep.subr.mxu0 0.0
    %2265 = vmatpush1.msra.mxu0 %v2238
    %2266 = vmatprep.subr.mxu0 0.0
    %2267 = vmatpush1.msra.mxu0 0.0
    %2268 = vmatprep.subr.mxu0 0.0
    %2269 = vmatpush1.msra.mxu0 0.0
    %2270 = vmatprep.subr.mxu0 0.0
    %2271 = vmatpush1.msra.mxu0 0.0
    %2272 = vmatprep.subr.mxu0 0.0
    %2273 = vmatpush1.msra.mxu0 0.0
    %2274 = vmatprep.subr.mxu0 0.0
    %2275 = vmatpush1.msra.mxu0 0.0
    %2276 = vmatprep.subr.mxu0 0.0
    %2277 = vmatpush1.msra.mxu0 0.0
    %2278 = vmatprep.subr.mxu0 0.0
    %2279 = vmatpush1.msra.mxu0 0.0
    %2280 = vmatprep.subr.mxu0 0.0
    %2281 = vmatpush1.msra.mxu0 0.0
    %2282 = vmatprep.subr.mxu0 0.0
    %2283 = vmatpush1.msra.mxu0 0.0
    %2284 = vmatprep.subr.mxu0 0.0
    %2285 = vmatpush1.msra.mxu0 0.0
    %2286 = vmatprep.subr.mxu0 0.0
    %2287 = vmatpush1.msra.mxu0 0.0
    %2288 = vmatprep.subr.mxu0 0.0
    %2289 = vmatpush1.msra.mxu0 0.0
    %2290 = vmatprep.subr.mxu0 0.0
    %2291 = vmatpush1.msra.mxu0 0.0
    %2292 = vmatprep.subr.mxu0 0.0
    %2293 = vmatpush1.msra.mxu0 0.0
    %2294 = vmatprep.subr.mxu0 0.0
    %2295 = vmatpush1.msra.mxu0 0.0
    %2296 = vmatprep.subr.mxu0 0.0
    %2297 = vmatpush1.msra.mxu0 0.0
    %2298 = vmatprep.subr.mxu0 0.0
    %2299 = vmatpush1.msra.mxu0 0.0
    %2300 = vmatprep.subr.mxu0 0.0
    %2301 = vmatpush1.msra.mxu0 0.0
    %2302 = vmatprep.subr.mxu0 0.0
    %2303 = vmatpush1.msra.mxu0 0.0
    %2304 = vmatprep.subr.mxu0 0.0
    %2305 = vmatpush1.msra.mxu0 0.0
    %2306 = vmatprep.subr.mxu0 0.0
    %2307 = vmatpush1.msra.mxu0 0.0
    %2308 = vmatprep.subr.mxu0 0.0
    %2309 = vmatpush1.msra.mxu0 0.0
    %2310 = vmatprep.subr.mxu0 0.0
    %2311 = vmatpush1.msra.mxu0 0.0
    %2312 = vmatprep.subr.mxu0 0.0
    %2313 = vmatpush1.msra.mxu0 0.0
    %2314 = vmatprep.mubr.f32.mxu0 0.0
    %2315 = vmatmul.mubr.f32.gmra.mrb[0].mxu0 %v2248
    %v2316 = vpop.f32.mrb[0].mxu0
    %v2317 = vadd.f32 %v2244, %v2316
    %v2318 = vpop.f32.mrb[0].mxu0
    %2319 = vdwg.mxu0
    %vm2320 = vcmask 11264
    %2321 = vst.msk [vmem:[%s15] sm:$0xf] %vm2320, %v2317
    // Predicated region
    $region78: #{tpu_custom_call.1} parent=1 // pred_check
      _
    $region79: #{tpu_custom_call.1} parent=1 // pred_check_branch
      %2323 = sbr.rel (0) target = $region81
    $region80: #{tpu_custom_call.1} parent=1 // pred_region
      _
    $region81: #{tpu_custom_call.1} parent=1 // pred_fallthru
      _
    // Predicated region
    $region82: #{tpu_custom_call.1} parent=1 // pred_check
      _
    $region83: #{tpu_custom_call.1} parent=1 // pred_check_branch
      %2325 = sbr.rel (0) target = $region85
    $region84: #{tpu_custom_call.1} parent=1 // pred_region
      _
    $region85: #{tpu_custom_call.1} parent=1 // pred_fallthru
      _
    %2326 = vsyncpa [#allocation5], 1
    %2327 = vsyncpa [#allocation7], 1
    %2328 = vsyncpa [#allocation10], 1

</llo_original>
